<compile_context>
chip_gen: v7x
topology: tpu7x:2x2x1
jax: 0.10.0
libtpu: 0.0.40
codegen_flags: <defaults>
</compile_context>

<pallas_src>
import numpy as np
import jax
import jax.numpy as jnp
from jax import lax
from jax.experimental import pallas as pl
from jax.experimental.pallas import tpu as pltpu

EPS = 1e-5  # PyTorch InstanceNorm2d default


def _residual_kernel(x_ref, w1_ref, b1_ref, g1_ref, be1_ref,
                     w2_ref, b2_ref, g2_ref, be2_ref, r_ref,
                     out_ref):
    # x_ref   : (Bt, H, W*C) lane-dense input block (also the residual source)
    # w*_ref  : (3, W*C, W*C) banded conv weights (one matrix per vertical tap;
    #           horizontal taps + horizontal reflection pad folded in)
    # b*/g*/be*_ref : (1, W*C) bias / gamma / beta tiled across W (f32)
    # r_ref   : (W*C, W*C) channel-reduction matrix (carries the 1/(H*W) factor)
    # out_ref : (Bt, H, W*C)
    Bt, H, WC = out_ref.shape
    M = Bt * H

    x = x_ref[...].astype(jnp.float32).reshape(M, WC)   # lane-dense (M, 128)

    # Row masks marking the first / last row of each sample; used to patch the
    # rolled slabs into per-sample vertical reflection padding.
    row = lax.broadcasted_iota(jnp.int32, (M, WC), 0)
    is_first = (row % H) == 0
    is_last = (row % H) == (H - 1)

    def conv3x3(src, w_ref, b_ref):
        cd = w_ref.dtype
        # Whole-slab sublane shifts; wrapped rows / cross-sample rows are
        # exactly the first/last rows of each sample and get fixed up below
        # to the reflection-padding values (row -1 -> row 1, row H -> row H-2).
        up0 = pltpu.roll(src, shift=1, axis=0)        # up0[i] = src[i-1]
        dn0 = pltpu.roll(src, shift=M - 1, axis=0)    # dn0[i] = src[i+1]
        up = jnp.where(is_first, dn0, up0).astype(cd)
        dn = jnp.where(is_last, up0, dn0).astype(cd)
        # Three lane-dense (M, WC) x (WC, WC) MXU matmuls, accumulation in f32.
        acc = jnp.dot(up, w_ref[0], preferred_element_type=jnp.float32)
        acc = acc + jnp.dot(src.astype(cd), w_ref[1],
                            preferred_element_type=jnp.float32)
        acc = acc + jnp.dot(dn, w_ref[2], preferred_element_type=jnp.float32)
        return acc + b_ref[...]

    def inst_norm(y, g_ref, be_ref):
        # One-pass stats (kept in f32): per-sample sublane reductions, then a
        # single matmul with r_ref sums over W per channel, scales by 1/(H*W)
        # and broadcasts back to every (w, c) lane for all samples at once.
        # TODO(synk): a two-pass (subtract-mean) variance is safer if the
        # post-conv means become large relative to the std.
        sq = y * y
        parts = [jnp.sum(y[b * H:(b + 1) * H], axis=0, keepdims=True)
                 for b in range(Bt)]
        parts += [jnp.sum(sq[b * H:(b + 1) * H], axis=0, keepdims=True)
                  for b in range(Bt)]
        stats = jnp.dot(jnp.concatenate(parts, axis=0), r_ref[...],
                        preferred_element_type=jnp.float32)   # (2*Bt, WC)
        mean = stats[:Bt]                                       # (Bt, WC)
        var = stats[Bt:] - mean * mean
        scale = g_ref[...] * lax.rsqrt(var + EPS)               # (Bt, WC)
        shift = be_ref[...] - mean * scale                      # (Bt, WC)
        y3 = y.reshape(Bt, H, WC)
        out = y3 * scale[:, None, :] + shift[:, None, :]
        return out.reshape(M, WC)

    y1 = conv3x3(x, w1_ref, b1_ref)
    y1 = jnp.maximum(inst_norm(y1, g1_ref, be1_ref), 0.0)       # ReLU
    y2 = conv3x3(y1, w2_ref, b2_ref)
    y2 = inst_norm(y2, g2_ref, be2_ref) + x                     # residual add
    out_ref[...] = y2.reshape(Bt, H, WC).astype(out_ref.dtype)


def _banded_weights(w_hwio, W, C):
    """Fold the kx taps and the horizontal reflection pad of a 3x3 conv into
    one banded (W*C, W*C) matrix per vertical tap ky."""
    idx = np.arange(W)
    refl = np.stack([idx + kx - 1 for kx in range(3)])        # (3, W), in [-1, W]
    refl = np.abs(refl)                                       # -1 -> 1 (reflect)
    refl = np.where(refl >= W, 2 * (W - 1) - refl, refl)      #  W -> W-2 (reflect)
    onehot = (refl[:, :, None] == np.arange(W)[None, None, :]
              ).astype(np.float32)                            # (kx, w_out, w_in)
    band = jnp.einsum('xoi,yxcd->yicod', jnp.asarray(onehot),
                      w_hwio.astype(jnp.float32))             # (3, W_in, C_in, W_out, C_out)
    return band.reshape(3, W * C, W * C)


def _num_tensorcores():
    """1 TensorCore per chip on v5e/v6e, 2 on v7x.  Best-effort detection."""
    try:
        kind = jax.devices()[0].device_kind.lower()
    except Exception:
        return 1
    return 2 if "v7" in kind else 1


def residual_forward(x_nchw, params, *, bt=None, conv_dtype=jnp.float32):
    """x_nchw: (B, C, H, W) float32 -> (B, C, H, W) float32."""
    w1, b1, g1, be1, w2, b2, g2, be2 = params
    B, C, H, W = x_nchw.shape
    assert H >= 2 and W >= 2, "reflection padding requires H, W >= 2"
    WC = W * C
    # NCHW -> NHWC -> lane-dense (B, H, W*C).
    x = jnp.transpose(x_nchw, (0, 2, 3, 1)).reshape(B, H, WC)

    if bt is None:
        # 1 grid step on single-TC chips (v5e/v6e); 2 parallel steps on v7x.
        bt = B
        if _num_tensorcores() >= 2 and B >= 2:
            bt = B // 2
    while B % bt:
        bt -= 1

    # conv_dtype=jnp.bfloat16 halves conv operand traffic on v6e/v7x (MXU
    # accumulation stays f32); keep f32 when exact 1e-3 parity is required.
    band1 = _banded_weights(w1, W, C).astype(conv_dtype)
    band2 = _banded_weights(w2, W, C).astype(conv_dtype)
    # Channel-reduction matrix: [(w,c),(w',c')] = (c == c') / (H*W).
    red = jnp.asarray(np.tile(np.eye(C, dtype=np.float32), (W, W)) / (H * W))
    tile_v = lambda v: jnp.tile(v.astype(jnp.float32), W).reshape(1, WC)

    const_w = pl.BlockSpec((3, WC, WC), lambda b: (0, 0, 0))
    const_v = pl.BlockSpec((1, WC), lambda b: (0, 0))
    const_r = pl.BlockSpec((WC, WC), lambda b: (0, 0))

    # VMEM per step ~1 MiB at this shape (weights dominate) — far below every
    # generation's limit.  For much larger H/W/C, tile H with a 1-row halo via
    # the index_map and budget against v7x's 64 MiB physical VMEM.
    out = pl.pallas_call(
        _residual_kernel,
        out_shape=jax.ShapeDtypeStruct((B, H, WC), x.dtype),
        grid_spec=pltpu.PrefetchScalarGridSpec(
            num_scalar_prefetch=0,
            grid=(B // bt,),
            in_specs=[
                pl.BlockSpec((bt, H, WC), lambda b: (b, 0, 0)),
                const_w, const_v, const_v, const_v,
                const_w, const_v, const_v, const_v,
                const_r,
            ],
            out_specs=pl.BlockSpec((bt, H, WC), lambda b: (b, 0, 0)),
        ),
        compiler_params=pltpu.CompilerParams(
            dimension_semantics=("parallel",)),
    )(x, band1, tile_v(b1), tile_v(g1), tile_v(be1),
      band2, tile_v(b2), tile_v(g2), tile_v(be2), red)

    return jnp.transpose(out.reshape(B, H, W, C), (0, 3, 1, 2))


# ---------- pure-JAX reference (for correctness check) ----------
def _reference(x_nchw, params):
    w1, b1, g1, be1, w2, b2, g2, be2 = params

    def conv(x, w, b):  # x NCHW, w HWIO
        xp = jnp.pad(x, ((0, 0), (0, 0), (1, 1), (1, 1)), mode="reflect")
        y = lax.conv_general_dilated(
            xp, w, window_strides=(1, 1), padding="VALID",
            dimension_numbers=("NCHW", "HWIO", "NCHW"))
        return y + b[None, :, None, None]

    def inorm(y, g, be):
        mean = jnp.mean(y, axis=(2, 3), keepdims=True)
        var = jnp.mean((y - mean) ** 2, axis=(2, 3), keepdims=True)
        return (y - mean) * lax.rsqrt(var + EPS) * g[None, :, None, None] \
            + be[None, :, None, None]

    y = jnp.maximum(inorm(conv(x_nchw, w1, b1), g1, be1), 0.0)
    y = inorm(conv(y, w2, b2), g2, be2)
    return y + x_nchw


if __name__ == "__main__":
    B, C, H, W = 2, 8, 16, 16          # W*C = 128 -> exact lane width
    key = jax.random.PRNGKey(0)
    k = jax.random.split(key, 5)

    x = jax.random.normal(k[0], (B, C, H, W), jnp.float32)

    scale = 1.0 / (C * 9) ** 0.5
    # conv weights stored HWIO (3, 3, C_in, C_out)
    w1 = jax.random.uniform(k[1], (3, 3, C, C), jnp.float32, -scale, scale)
    b1 = jax.random.uniform(k[2], (C,), jnp.float32, -scale, scale)
    w2 = jax.random.uniform(k[3], (3, 3, C, C), jnp.float32, -scale, scale)
    b2 = jax.random.uniform(k[4], (C,), jnp.float32, -scale, scale)
    # InstanceNorm2d(affine=True) init: weight=1, bias=0
    g1 = jnp.ones((C,), jnp.float32)
    be1 = jnp.zeros((C,), jnp.float32)
    g2 = jnp.ones((C,), jnp.float32)
    be2 = jnp.zeros((C,), jnp.float32)

    params = (w1, b1, g1, be1, w2, b2, g2, be2)

    fwd = jax.jit(residual_forward)      # fuse wrapper transposes / constants
    out = jax.block_until_ready(fwd(x, params))
    ref = jax.block_until_ready(_reference(x, params))

    assert out.shape == (B, C, H, W)
    err = float(jnp.max(jnp.abs(out - ref)))
    assert jnp.allclose(out, ref, rtol=1e-3, atol=1e-3), f"max abs err {err}"
    print("KERNEL_OK")
</pallas_src>

<mosaic_0001>
module attributes {stable_mosaic.version = 11 : i64} {
  func.func @_residual_kernel(%arg0: i32, %arg1: memref<2x16x128xf32, #tpu.memory_space<vmem>>, %arg2: memref<3x128x128xf32, #tpu.memory_space<vmem>>, %arg3: memref<1x128xf32, #tpu.memory_space<vmem>>, %arg4: memref<1x128xf32, #tpu.memory_space<vmem>>, %arg5: memref<1x128xf32, #tpu.memory_space<vmem>>, %arg6: memref<3x128x128xf32, #tpu.memory_space<vmem>>, %arg7: memref<1x128xf32, #tpu.memory_space<vmem>>, %arg8: memref<1x128xf32, #tpu.memory_space<vmem>>, %arg9: memref<1x128xf32, #tpu.memory_space<vmem>>, %arg10: memref<128x128xf32, #tpu.memory_space<vmem>>, %arg11: memref<2x16x128xf32, #tpu.memory_space<vmem>>) attributes {dimension_semantics = [#tpu.dimension_semantics<parallel>], iteration_bounds = array<i64: 1>, scalar_prefetch = 0 : i64, scratch_operands = 0 : i64, tpu.core_type = #tpu.core_type<tc>, window_params = [{transform_indices = @transform_0, window_bounds = array<i64: 2, 16, 128>}, {pipeline_mode = #tpu.pipeline_mode<synchronous>, transform_indices = @transform_1, window_bounds = array<i64: 3, 128, 128>}, {pipeline_mode = #tpu.pipeline_mode<synchronous>, transform_indices = @transform_2, window_bounds = array<i64: 1, 128>}, {pipeline_mode = #tpu.pipeline_mode<synchronous>, transform_indices = @transform_3, window_bounds = array<i64: 1, 128>}, {pipeline_mode = #tpu.pipeline_mode<synchronous>, transform_indices = @transform_4, window_bounds = array<i64: 1, 128>}, {pipeline_mode = #tpu.pipeline_mode<synchronous>, transform_indices = @transform_5, window_bounds = array<i64: 3, 128, 128>}, {pipeline_mode = #tpu.pipeline_mode<synchronous>, transform_indices = @transform_6, window_bounds = array<i64: 1, 128>}, {pipeline_mode = #tpu.pipeline_mode<synchronous>, transform_indices = @transform_7, window_bounds = array<i64: 1, 128>}, {pipeline_mode = #tpu.pipeline_mode<synchronous>, transform_indices = @transform_8, window_bounds = array<i64: 1, 128>}, {pipeline_mode = #tpu.pipeline_mode<synchronous>, transform_indices = @transform_9, window_bounds = array<i64: 128, 128>}, {transform_indices = @transform_10, window_bounds = array<i64: 2, 16, 128>}]} {
    %c0 = arith.constant 0 : index
    %c0_0 = arith.constant 0 : index
    %c0_1 = arith.constant 0 : index
    %0 = vector.load %arg1[%c0, %c0_0, %c0_1] : memref<2x16x128xf32, #tpu.memory_space<vmem>>, vector<2x16x128xf32>
    %1 = vector.shape_cast %0 : vector<2x16x128xf32> to vector<32x128xf32>
    %2 = tpu.iota {dimensions = array<i32: 0>} : vector<32x128xi32>
    %c16_i32 = arith.constant 16 : i32
    %c0_i32 = arith.constant 0 : i32
    %3 = arith.cmpi eq, %c16_i32, %c0_i32 : i32
    %c1_i32 = arith.constant 1 : i32
    %4 = arith.select %3, %c1_i32, %c16_i32 : i32
    %5 = vector.broadcast %4 : i32 to vector<32x128xi32>
    %6 = arith.remsi %2, %5 : vector<32x128xi32>
    %c0_i32_2 = arith.constant 0 : i32
    %7 = vector.broadcast %c0_i32_2 : i32 to vector<32x128xi32>
    %8 = arith.cmpi ne, %6, %7 : vector<32x128xi32>
    %c0_i32_3 = arith.constant 0 : i32
    %9 = vector.broadcast %c0_i32_3 : i32 to vector<32x128xi32>
    %10 = arith.cmpi slt, %6, %9 : vector<32x128xi32>
    %c0_i32_4 = arith.constant 0 : i32
    %11 = arith.cmpi slt, %4, %c0_i32_4 : i32
    %12 = vector.broadcast %11 : i1 to vector<32x128xi1>
    %13 = vector.broadcast %12 : vector<32x128xi1> to vector<32x128xi1>
    %14 = arith.xori %10, %13 : vector<32x128xi1>
    %15 = arith.andi %14, %8 : vector<32x128xi1>
    %16 = vector.broadcast %4 : i32 to vector<32x128xi32>
    %17 = arith.addi %6, %16 : vector<32x128xi32>
    %18 = arith.select %15, %17, %6 : vector<32x128xi1>, vector<32x128xi32>
    %c0_i32_5 = arith.constant 0 : i32
    %19 = vector.broadcast %c0_i32_5 : i32 to vector<32x128xi32>
    %20 = arith.cmpi eq, %18, %19 : vector<32x128xi32>
    %c16_i32_6 = arith.constant 16 : i32
    %c0_i32_7 = arith.constant 0 : i32
    %21 = arith.cmpi eq, %c16_i32_6, %c0_i32_7 : i32
    %c1_i32_8 = arith.constant 1 : i32
    %22 = arith.select %21, %c1_i32_8, %c16_i32_6 : i32
    %23 = vector.broadcast %22 : i32 to vector<32x128xi32>
    %24 = arith.remsi %2, %23 : vector<32x128xi32>
    %c0_i32_9 = arith.constant 0 : i32
    %25 = vector.broadcast %c0_i32_9 : i32 to vector<32x128xi32>
    %26 = arith.cmpi ne, %24, %25 : vector<32x128xi32>
    %c0_i32_10 = arith.constant 0 : i32
    %27 = vector.broadcast %c0_i32_10 : i32 to vector<32x128xi32>
    %28 = arith.cmpi slt, %24, %27 : vector<32x128xi32>
    %c0_i32_11 = arith.constant 0 : i32
    %29 = arith.cmpi slt, %22, %c0_i32_11 : i32
    %30 = vector.broadcast %29 : i1 to vector<32x128xi1>
    %31 = vector.broadcast %30 : vector<32x128xi1> to vector<32x128xi1>
    %32 = arith.xori %28, %31 : vector<32x128xi1>
    %33 = arith.andi %32, %26 : vector<32x128xi1>
    %34 = vector.broadcast %22 : i32 to vector<32x128xi32>
    %35 = arith.addi %24, %34 : vector<32x128xi32>
    %36 = arith.select %33, %35, %24 : vector<32x128xi1>, vector<32x128xi32>
    %c15_i32 = arith.constant 15 : i32
    %37 = vector.broadcast %c15_i32 : i32 to vector<32x128xi32>
    %38 = arith.cmpi eq, %36, %37 : vector<32x128xi32>
    %c1_i32_12 = arith.constant 1 : i32
    %39 = tpu.dynamic_rotate %1 by %c1_i32_12 dim 0 : vector<32x128xf32>, i32 -> vector<32x128xf32>
    %c31_i32 = arith.constant 31 : i32
    %40 = tpu.dynamic_rotate %1 by %c31_i32 dim 0 : vector<32x128xf32>, i32 -> vector<32x128xf32>
    %41 = arith.select %20, %40, %39 : vector<32x128xi1>, vector<32x128xf32>
    %42 = arith.select %38, %39, %40 : vector<32x128xi1>, vector<32x128xf32>
    %c0_13 = arith.constant 0 : index
    %c0_14 = arith.constant 0 : index
    %c0_15 = arith.constant 0 : index
    %43 = vector.load %arg2[%c0_13, %c0_14, %c0_15] : memref<3x128x128xf32, #tpu.memory_space<vmem>>, vector<1x128x128xf32>
    %44 = vector.shape_cast %43 : vector<1x128x128xf32> to vector<128x128xf32>
    %cst = arith.constant dense<0.000000e+00> : vector<32x128xf32>
    %45 = tpu.matmul %41, %44, %cst {dimension_numbers = #tpu.dot_dimension_numbers<[1], [0], [0], [1], [0, 0, 1, 1], [], []>} : vector<32x128xf32>, vector<128x128xf32>, vector<32x128xf32> -> vector<32x128xf32>
    %c1 = arith.constant 1 : index
    %c0_16 = arith.constant 0 : index
    %c0_17 = arith.constant 0 : index
    %46 = vector.load %arg2[%c1, %c0_16, %c0_17] : memref<3x128x128xf32, #tpu.memory_space<vmem>>, vector<1x128x128xf32>
    %47 = vector.shape_cast %46 : vector<1x128x128xf32> to vector<128x128xf32>
    %cst_18 = arith.constant dense<0.000000e+00> : vector<32x128xf32>
    %48 = tpu.matmul %1, %47, %cst_18 {dimension_numbers = #tpu.dot_dimension_numbers<[1], [0], [0], [1], [0, 0, 1, 1], [], []>} : vector<32x128xf32>, vector<128x128xf32>, vector<32x128xf32> -> vector<32x128xf32>
    %49 = arith.addf %45, %48 : vector<32x128xf32>
    %c2 = arith.constant 2 : index
    %c0_19 = arith.constant 0 : index
    %c0_20 = arith.constant 0 : index
    %50 = vector.load %arg2[%c2, %c0_19, %c0_20] : memref<3x128x128xf32, #tpu.memory_space<vmem>>, vector<1x128x128xf32>
    %51 = vector.shape_cast %50 : vector<1x128x128xf32> to vector<128x128xf32>
    %cst_21 = arith.constant dense<0.000000e+00> : vector<32x128xf32>
    %52 = tpu.matmul %42, %51, %cst_21 {dimension_numbers = #tpu.dot_dimension_numbers<[1], [0], [0], [1], [0, 0, 1, 1], [], []>} : vector<32x128xf32>, vector<128x128xf32>, vector<32x128xf32> -> vector<32x128xf32>
    %53 = arith.addf %49, %52 : vector<32x128xf32>
    %c0_22 = arith.constant 0 : index
    %c0_23 = arith.constant 0 : index
    %54 = vector.load %arg3[%c0_22, %c0_23] : memref<1x128xf32, #tpu.memory_space<vmem>>, vector<1x128xf32>
    %55 = vector.broadcast %54 : vector<1x128xf32> to vector<32x128xf32>
    %56 = arith.addf %53, %55 : vector<32x128xf32>
    %57 = arith.mulf %56, %56 : vector<32x128xf32>
    %58 = vector.extract_strided_slice %56 {offsets = [0, 0], sizes = [16, 128], strides = [1, 1]} : vector<32x128xf32> to vector<16x128xf32>
    %cst_24 = arith.constant dense<0.000000e+00> : vector<128xf32>
    %59 = vector.multi_reduction <add>, %58, %cst_24 [0] : vector<16x128xf32> to vector<128xf32>
    %60 = vector.shape_cast %59 : vector<128xf32> to vector<1x128xf32>
    %61 = vector.extract_strided_slice %56 {offsets = [16, 0], sizes = [16, 128], strides = [1, 1]} : vector<32x128xf32> to vector<16x128xf32>
    %cst_25 = arith.constant dense<0.000000e+00> : vector<128xf32>
    %62 = vector.multi_reduction <add>, %61, %cst_25 [0] : vector<16x128xf32> to vector<128xf32>
    %63 = vector.shape_cast %62 : vector<128xf32> to vector<1x128xf32>
    %64 = vector.extract_strided_slice %57 {offsets = [0, 0], sizes = [16, 128], strides = [1, 1]} : vector<32x128xf32> to vector<16x128xf32>
    %cst_26 = arith.constant dense<0.000000e+00> : vector<128xf32>
    %65 = vector.multi_reduction <add>, %64, %cst_26 [0] : vector<16x128xf32> to vector<128xf32>
    %66 = vector.shape_cast %65 : vector<128xf32> to vector<1x128xf32>
    %67 = vector.extract_strided_slice %57 {offsets = [16, 0], sizes = [16, 128], strides = [1, 1]} : vector<32x128xf32> to vector<16x128xf32>
    %cst_27 = arith.constant dense<0.000000e+00> : vector<128xf32>
    %68 = vector.multi_reduction <add>, %67, %cst_27 [0] : vector<16x128xf32> to vector<128xf32>
    %69 = vector.shape_cast %68 : vector<128xf32> to vector<1x128xf32>
    %70 = tpu.concatenate %60, %63, %66, %69 in 0 : vector<1x128xf32>, vector<1x128xf32>, vector<1x128xf32>, vector<1x128xf32> -> vector<4x128xf32>
    %c0_28 = arith.constant 0 : index
    %c0_29 = arith.constant 0 : index
    %71 = vector.load %arg10[%c0_28, %c0_29] : memref<128x128xf32, #tpu.memory_space<vmem>>, vector<128x128xf32>
    %cst_30 = arith.constant dense<0.000000e+00> : vector<4x128xf32>
    %72 = tpu.matmul %70, %71, %cst_30 {dimension_numbers = #tpu.dot_dimension_numbers<[1], [0], [0], [1], [0, 0, 1, 1], [], []>} : vector<4x128xf32>, vector<128x128xf32>, vector<4x128xf32> -> vector<4x128xf32>
    %73 = vector.extract_strided_slice %72 {offsets = [0, 0], sizes = [2, 128], strides = [1, 1]} : vector<4x128xf32> to vector<2x128xf32>
    %74 = vector.extract_strided_slice %72 {offsets = [2, 0], sizes = [2, 128], strides = [1, 1]} : vector<4x128xf32> to vector<2x128xf32>
    %75 = arith.mulf %73, %73 : vector<2x128xf32>
    %76 = arith.subf %74, %75 : vector<2x128xf32>
    %c0_31 = arith.constant 0 : index
    %c0_32 = arith.constant 0 : index
    %77 = vector.load %arg4[%c0_31, %c0_32] : memref<1x128xf32, #tpu.memory_space<vmem>>, vector<1x128xf32>
    %cst_33 = arith.constant 9.99999974E-6 : f32
    %78 = vector.broadcast %cst_33 : f32 to vector<2x128xf32>
    %79 = arith.addf %76, %78 : vector<2x128xf32>
    %80 = math.rsqrt %79 : vector<2x128xf32>
    %81 = vector.broadcast %77 : vector<1x128xf32> to vector<2x128xf32>
    %82 = arith.mulf %81, %80 : vector<2x128xf32>
    %c0_34 = arith.constant 0 : index
    %c0_35 = arith.constant 0 : index
    %83 = vector.load %arg5[%c0_34, %c0_35] : memref<1x128xf32, #tpu.memory_space<vmem>>, vector<1x128xf32>
    %84 = arith.mulf %73, %82 : vector<2x128xf32>
    %85 = vector.broadcast %83 : vector<1x128xf32> to vector<2x128xf32>
    %86 = arith.subf %85, %84 : vector<2x128xf32>
    %87 = vector.shape_cast %56 : vector<32x128xf32> to vector<2x16x128xf32>
    %88 = vector.shape_cast %82 : vector<2x128xf32> to vector<2x1x128xf32>
    %89 = vector.broadcast %88 : vector<2x1x128xf32> to vector<2x16x128xf32>
    %90 = arith.mulf %87, %89 : vector<2x16x128xf32>
    %91 = vector.shape_cast %86 : vector<2x128xf32> to vector<2x1x128xf32>
    %92 = vector.broadcast %91 : vector<2x1x128xf32> to vector<2x16x128xf32>
    %93 = arith.addf %90, %92 : vector<2x16x128xf32>
    %94 = vector.shape_cast %93 : vector<2x16x128xf32> to vector<32x128xf32>
    %cst_36 = arith.constant 0.000000e+00 : f32
    %95 = vector.broadcast %cst_36 : f32 to vector<32x128xf32>
    %96 = arith.maximumf %94, %95 : vector<32x128xf32>
    %c1_i32_37 = arith.constant 1 : i32
    %97 = tpu.dynamic_rotate %96 by %c1_i32_37 dim 0 : vector<32x128xf32>, i32 -> vector<32x128xf32>
    %c31_i32_38 = arith.constant 31 : i32
    %98 = tpu.dynamic_rotate %96 by %c31_i32_38 dim 0 : vector<32x128xf32>, i32 -> vector<32x128xf32>
    %99 = arith.select %20, %98, %97 : vector<32x128xi1>, vector<32x128xf32>
    %100 = arith.select %38, %97, %98 : vector<32x128xi1>, vector<32x128xf32>
    %c0_39 = arith.constant 0 : index
    %c0_40 = arith.constant 0 : index
    %c0_41 = arith.constant 0 : index
    %101 = vector.load %arg6[%c0_39, %c0_40, %c0_41] : memref<3x128x128xf32, #tpu.memory_space<vmem>>, vector<1x128x128xf32>
    %102 = vector.shape_cast %101 : vector<1x128x128xf32> to vector<128x128xf32>
    %cst_42 = arith.constant dense<0.000000e+00> : vector<32x128xf32>
    %103 = tpu.matmul %99, %102, %cst_42 {dimension_numbers = #tpu.dot_dimension_numbers<[1], [0], [0], [1], [0, 0, 1, 1], [], []>} : vector<32x128xf32>, vector<128x128xf32>, vector<32x128xf32> -> vector<32x128xf32>
    %c1_43 = arith.constant 1 : index
    %c0_44 = arith.constant 0 : index
    %c0_45 = arith.constant 0 : index
    %104 = vector.load %arg6[%c1_43, %c0_44, %c0_45] : memref<3x128x128xf32, #tpu.memory_space<vmem>>, vector<1x128x128xf32>
    %105 = vector.shape_cast %104 : vector<1x128x128xf32> to vector<128x128xf32>
    %cst_46 = arith.constant dense<0.000000e+00> : vector<32x128xf32>
    %106 = tpu.matmul %96, %105, %cst_46 {dimension_numbers = #tpu.dot_dimension_numbers<[1], [0], [0], [1], [0, 0, 1, 1], [], []>} : vector<32x128xf32>, vector<128x128xf32>, vector<32x128xf32> -> vector<32x128xf32>
    %107 = arith.addf %103, %106 : vector<32x128xf32>
    %c2_47 = arith.constant 2 : index
    %c0_48 = arith.constant 0 : index
    %c0_49 = arith.constant 0 : index
    %108 = vector.load %arg6[%c2_47, %c0_48, %c0_49] : memref<3x128x128xf32, #tpu.memory_space<vmem>>, vector<1x128x128xf32>
    %109 = vector.shape_cast %108 : vector<1x128x128xf32> to vector<128x128xf32>
    %cst_50 = arith.constant dense<0.000000e+00> : vector<32x128xf32>
    %110 = tpu.matmul %100, %109, %cst_50 {dimension_numbers = #tpu.dot_dimension_numbers<[1], [0], [0], [1], [0, 0, 1, 1], [], []>} : vector<32x128xf32>, vector<128x128xf32>, vector<32x128xf32> -> vector<32x128xf32>
    %111 = arith.addf %107, %110 : vector<32x128xf32>
    %c0_51 = arith.constant 0 : index
    %c0_52 = arith.constant 0 : index
    %112 = vector.load %arg7[%c0_51, %c0_52] : memref<1x128xf32, #tpu.memory_space<vmem>>, vector<1x128xf32>
    %113 = vector.broadcast %112 : vector<1x128xf32> to vector<32x128xf32>
    %114 = arith.addf %111, %113 : vector<32x128xf32>
    %115 = arith.mulf %114, %114 : vector<32x128xf32>
    %116 = vector.extract_strided_slice %114 {offsets = [0, 0], sizes = [16, 128], strides = [1, 1]} : vector<32x128xf32> to vector<16x128xf32>
    %cst_53 = arith.constant dense<0.000000e+00> : vector<128xf32>
    %117 = vector.multi_reduction <add>, %116, %cst_53 [0] : vector<16x128xf32> to vector<128xf32>
    %118 = vector.shape_cast %117 : vector<128xf32> to vector<1x128xf32>
    %119 = vector.extract_strided_slice %114 {offsets = [16, 0], sizes = [16, 128], strides = [1, 1]} : vector<32x128xf32> to vector<16x128xf32>
    %cst_54 = arith.constant dense<0.000000e+00> : vector<128xf32>
    %120 = vector.multi_reduction <add>, %119, %cst_54 [0] : vector<16x128xf32> to vector<128xf32>
    %121 = vector.shape_cast %120 : vector<128xf32> to vector<1x128xf32>
    %122 = vector.extract_strided_slice %115 {offsets = [0, 0], sizes = [16, 128], strides = [1, 1]} : vector<32x128xf32> to vector<16x128xf32>
    %cst_55 = arith.constant dense<0.000000e+00> : vector<128xf32>
    %123 = vector.multi_reduction <add>, %122, %cst_55 [0] : vector<16x128xf32> to vector<128xf32>
    %124 = vector.shape_cast %123 : vector<128xf32> to vector<1x128xf32>
    %125 = vector.extract_strided_slice %115 {offsets = [16, 0], sizes = [16, 128], strides = [1, 1]} : vector<32x128xf32> to vector<16x128xf32>
    %cst_56 = arith.constant dense<0.000000e+00> : vector<128xf32>
    %126 = vector.multi_reduction <add>, %125, %cst_56 [0] : vector<16x128xf32> to vector<128xf32>
    %127 = vector.shape_cast %126 : vector<128xf32> to vector<1x128xf32>
    %128 = tpu.concatenate %118, %121, %124, %127 in 0 : vector<1x128xf32>, vector<1x128xf32>, vector<1x128xf32>, vector<1x128xf32> -> vector<4x128xf32>
    %c0_57 = arith.constant 0 : index
    %c0_58 = arith.constant 0 : index
    %129 = vector.load %arg10[%c0_57, %c0_58] : memref<128x128xf32, #tpu.memory_space<vmem>>, vector<128x128xf32>
    %cst_59 = arith.constant dense<0.000000e+00> : vector<4x128xf32>
    %130 = tpu.matmul %128, %129, %cst_59 {dimension_numbers = #tpu.dot_dimension_numbers<[1], [0], [0], [1], [0, 0, 1, 1], [], []>} : vector<4x128xf32>, vector<128x128xf32>, vector<4x128xf32> -> vector<4x128xf32>
    %131 = vector.extract_strided_slice %130 {offsets = [0, 0], sizes = [2, 128], strides = [1, 1]} : vector<4x128xf32> to vector<2x128xf32>
    %132 = vector.extract_strided_slice %130 {offsets = [2, 0], sizes = [2, 128], strides = [1, 1]} : vector<4x128xf32> to vector<2x128xf32>
    %133 = arith.mulf %131, %131 : vector<2x128xf32>
    %134 = arith.subf %132, %133 : vector<2x128xf32>
    %c0_60 = arith.constant 0 : index
    %c0_61 = arith.constant 0 : index
    %135 = vector.load %arg8[%c0_60, %c0_61] : memref<1x128xf32, #tpu.memory_space<vmem>>, vector<1x128xf32>
    %cst_62 = arith.constant 9.99999974E-6 : f32
    %136 = vector.broadcast %cst_62 : f32 to vector<2x128xf32>
    %137 = arith.addf %134, %136 : vector<2x128xf32>
    %138 = math.rsqrt %137 : vector<2x128xf32>
    %139 = vector.broadcast %135 : vector<1x128xf32> to vector<2x128xf32>
    %140 = arith.mulf %139, %138 : vector<2x128xf32>
    %c0_63 = arith.constant 0 : index
    %c0_64 = arith.constant 0 : index
    %141 = vector.load %arg9[%c0_63, %c0_64] : memref<1x128xf32, #tpu.memory_space<vmem>>, vector<1x128xf32>
    %142 = arith.mulf %131, %140 : vector<2x128xf32>
    %143 = vector.broadcast %141 : vector<1x128xf32> to vector<2x128xf32>
    %144 = arith.subf %143, %142 : vector<2x128xf32>
    %145 = vector.shape_cast %114 : vector<32x128xf32> to vector<2x16x128xf32>
    %146 = vector.shape_cast %140 : vector<2x128xf32> to vector<2x1x128xf32>
    %147 = vector.broadcast %146 : vector<2x1x128xf32> to vector<2x16x128xf32>
    %148 = arith.mulf %145, %147 : vector<2x16x128xf32>
    %149 = vector.shape_cast %144 : vector<2x128xf32> to vector<2x1x128xf32>
    %150 = vector.broadcast %149 : vector<2x1x128xf32> to vector<2x16x128xf32>
    %151 = arith.addf %148, %150 : vector<2x16x128xf32>
    %152 = vector.shape_cast %151 : vector<2x16x128xf32> to vector<32x128xf32>
    %153 = arith.addf %152, %1 : vector<32x128xf32>
    %154 = vector.shape_cast %153 : vector<32x128xf32> to vector<2x16x128xf32>
    %c0_65 = arith.constant 0 : index
    %c0_66 = arith.constant 0 : index
    %c0_67 = arith.constant 0 : index
    %155 = vector.load %arg11[%c0_65, %c0_66, %c0_67] : memref<2x16x128xf32, #tpu.memory_space<vmem>>, vector<2x16x128xf32>
    tpu.vector_store %arg11[%c0_65, %c0_66, %c0_67], %154 {strides = array<i32>} : memref<2x16x128xf32, #tpu.memory_space<vmem>>, vector<2x16x128xf32>,
    return
  }
  func.func @transform_0(%arg0: i32) -> (i32, i32, i32) {
    %c0_i32 = arith.constant 0 : i32
    %c0_i32_0 = arith.constant 0 : i32
    %c0_i32_1 = arith.constant 0 : i32
    return %arg0, %c0_i32, %c0_i32_0 : i32, i32, i32
  }
  func.func @transform_1(%arg0: i32) -> (i32, i32, i32) {
    %c0_i32 = arith.constant 0 : i32
    %c0_i32_0 = arith.constant 0 : i32
    %c0_i32_1 = arith.constant 0 : i32
    %c0_i32_2 = arith.constant 0 : i32
    return %c0_i32, %c0_i32_0, %c0_i32_1 : i32, i32, i32
  }
  func.func @transform_2(%arg0: i32) -> (i32, i32) {
    %c0_i32 = arith.constant 0 : i32
    %c0_i32_0 = arith.constant 0 : i32
    %c0_i32_1 = arith.constant 0 : i32
    return %c0_i32, %c0_i32_0 : i32, i32
  }
  func.func @transform_3(%arg0: i32) -> (i32, i32) {
    %c0_i32 = arith.constant 0 : i32
    %c0_i32_0 = arith.constant 0 : i32
    %c0_i32_1 = arith.constant 0 : i32
    return %c0_i32, %c0_i32_0 : i32, i32
  }
  func.func @transform_4(%arg0: i32) -> (i32, i32) {
    %c0_i32 = arith.constant 0 : i32
    %c0_i32_0 = arith.constant 0 : i32
    %c0_i32_1 = arith.constant 0 : i32
    return %c0_i32, %c0_i32_0 : i32, i32
  }
  func.func @transform_5(%arg0: i32) -> (i32, i32, i32) {
    %c0_i32 = arith.constant 0 : i32
    %c0_i32_0 = arith.constant 0 : i32
    %c0_i32_1 = arith.constant 0 : i32
    %c0_i32_2 = arith.constant 0 : i32
    return %c0_i32, %c0_i32_0, %c0_i32_1 : i32, i32, i32
  }
  func.func @transform_6(%arg0: i32) -> (i32, i32) {
    %c0_i32 = arith.constant 0 : i32
    %c0_i32_0 = arith.constant 0 : i32
    %c0_i32_1 = arith.constant 0 : i32
    return %c0_i32, %c0_i32_0 : i32, i32
  }
  func.func @transform_7(%arg0: i32) -> (i32, i32) {
    %c0_i32 = arith.constant 0 : i32
    %c0_i32_0 = arith.constant 0 : i32
    %c0_i32_1 = arith.constant 0 : i32
    return %c0_i32, %c0_i32_0 : i32, i32
  }
  func.func @transform_8(%arg0: i32) -> (i32, i32) {
    %c0_i32 = arith.constant 0 : i32
    %c0_i32_0 = arith.constant 0 : i32
    %c0_i32_1 = arith.constant 0 : i32
    return %c0_i32, %c0_i32_0 : i32, i32
  }
  func.func @transform_9(%arg0: i32) -> (i32, i32) {
    %c0_i32 = arith.constant 0 : i32
    %c0_i32_0 = arith.constant 0 : i32
    %c0_i32_1 = arith.constant 0 : i32
    return %c0_i32, %c0_i32_0 : i32, i32
  }
  func.func @transform_10(%arg0: i32) -> (i32, i32, i32) {
    %c0_i32 = arith.constant 0 : i32
    %c0_i32_0 = arith.constant 0 : i32
    %c0_i32_1 = arith.constant 0 : i32
    return %arg0, %c0_i32, %c0_i32_0 : i32, i32, i32
  }
}

</mosaic_0001>

<llo_original>
// kernel: tile.33
$region0: #{tile.33}
  #allocation0 [shape = 's32[1]{0}', space=sflag, size = 0x4, scoped, tag = 'scoped memory for tile.33']
  %s0 = inlined_call_operand.vmem [shape: f32[8], index: 0, kind: input, shape index: {}]
  %s1 = inlined_call_operand.vmem [shape: f32[16,8], index: 1, kind: output, shape index: {}]
  // Predicated region
  $region2: #{tile.33} parent=0 // pred_check
    _
  $region3: #{tile.33} parent=0 // pred_check_branch
    %3 = sbr.rel (0) target = $region5
  $region4: #{tile.33} parent=0 // pred_region
    _
  $region5: #{tile.33} parent=0 // pred_fallthru
    _
  %v4 = vld [vmem:[%s0] ss:$0 sm:$0xff]
  %5 = vst [vmem:[%s1] sm:$0xff] %v4
  %s6 = scalar_lea.vmem %s1, 8
  %7 = vst [vmem:[%s6] sm:$0xff] %v4

// kernel: tile.34
$region0: #{tile.34}
  %s0 = inlined_call_operand.vmem [shape: f32[16,8], index: 0, kind: input, shape index: {}]
  %s1 = inlined_call_operand.vmem [shape: f32[1,128], index: 1, kind: output, shape index: {}]
  $region1: #{tile.34} parent=0
    #allocation0 [shape = 'u8[4096]{0}', space=vmem, size = 0x1000, scoped, tag = 'scoped mem for output reshape']
    %v2 = vld [vmem:[%s0] sm:$0x1]
    %vm3 = vcmask 64512
    %4 = vst.msk [vmem:[#allocation0] sm:$0x1] %vm3, %v2
    %s5 = scalar_lea.vmem %s0, 15
    %v6 = vld [vmem:[%s5] sm:$0x1]
    %7 = vrot.lane.b32.xlu0 %v6, 120
    %v8 = vpop.permute.xlu0 %7
    %vm9 = vcmask 1048512
    %10 = vst.msk [vmem:[#allocation0] sm:$0x1] %vm9, %v8
    %s11 = scalar_lea.vmem %s0, 14
    %v12 = vld [vmem:[%s11] sm:$0x1]
    %13 = vrot.lane.b32.xlu0 %v12, 112
    %v14 = vpop.permute.xlu0 %13
    %vm15 = vcmask 982912
    %16 = vst.msk [vmem:[#allocation0] sm:$0x1] %vm15, %v14
    %s17 = scalar_lea.vmem %s0, 13
    %v18 = vld [vmem:[%s17] sm:$0x1]
    %19 = vrot.lane.b32.xlu0 %v18, 104
    %v20 = vpop.permute.xlu0 %19
    %vm21 = vcmask 917312
    %22 = vst.msk [vmem:[#allocation0] sm:$0x1] %vm21, %v20
    %s23 = scalar_lea.vmem %s0, 12
    %v24 = vld [vmem:[%s23] sm:$0x1]
    %25 = vrot.lane.b32.xlu0 %v24, 96
    %v26 = vpop.permute.xlu0 %25
    %vm27 = vcmask 851712
    %28 = vst.msk [vmem:[#allocation0] sm:$0x1] %vm27, %v26
    %s29 = scalar_lea.vmem %s0, 11
    %v30 = vld [vmem:[%s29] sm:$0x1]
    %31 = vrot.lane.b32.xlu0 %v30, 88
    %v32 = vpop.permute.xlu0 %31
    %vm33 = vcmask 786112
    %34 = vst.msk [vmem:[#allocation0] sm:$0x1] %vm33, %v32
    %s35 = scalar_lea.vmem %s0, 10
    %v36 = vld [vmem:[%s35] sm:$0x1]
    %37 = vrot.lane.b32.xlu0 %v36, 80
    %v38 = vpop.permute.xlu0 %37
    %vm39 = vcmask 720512
    %40 = vst.msk [vmem:[#allocation0] sm:$0x1] %vm39, %v38
    %s41 = scalar_lea.vmem %s0, 9
    %v42 = vld [vmem:[%s41] sm:$0x1]
    %43 = vrot.lane.b32.xlu0 %v42, 72
    %v44 = vpop.permute.xlu0 %43
    %vm45 = vcmask 654912
    %46 = vst.msk [vmem:[#allocation0] sm:$0x1] %vm45, %v44
    %s47 = scalar_lea.vmem %s0, 8
    %v48 = vld [vmem:[%s47] sm:$0x1]
    %49 = vrot.lane.b32.xlu0 %v48, 64
    %v50 = vpop.permute.xlu0 %49
    %vm51 = vcmask 589312
    %52 = vst.msk [vmem:[#allocation0] sm:$0x1] %vm51, %v50
    %s53 = scalar_lea.vmem %s0, 7
    %v54 = vld [vmem:[%s53] sm:$0x1]
    %55 = vrot.lane.b32.xlu0 %v54, 56
    %v56 = vpop.permute.xlu0 %55
    %vm57 = vcmask 523712
    %58 = vst.msk [vmem:[#allocation0] sm:$0x1] %vm57, %v56
    %s59 = scalar_lea.vmem %s0, 6
    %v60 = vld [vmem:[%s59] sm:$0x1]
    %61 = vrot.lane.b32.xlu0 %v60, 48
    %v62 = vpop.permute.xlu0 %61
    %vm63 = vcmask 458112
    %64 = vst.msk [vmem:[#allocation0] sm:$0x1] %vm63, %v62
    %s65 = scalar_lea.vmem %s0, 5
    %v66 = vld [vmem:[%s65] sm:$0x1]
    %67 = vrot.lane.b32.xlu0 %v66, 40
    %v68 = vpop.permute.xlu0 %67
    %vm69 = vcmask 392512
    %70 = vst.msk [vmem:[#allocation0] sm:$0x1] %vm69, %v68
    %s71 = scalar_lea.vmem %s0, 4
    %v72 = vld [vmem:[%s71] sm:$0x1]
    %73 = vrot.lane.b32.xlu0 %v72, 32
    %v74 = vpop.permute.xlu0 %73
    %vm75 = vcmask 326912
    %76 = vst.msk [vmem:[#allocation0] sm:$0x1] %vm75, %v74
    %s77 = scalar_lea.vmem %s0, 3
    %v78 = vld [vmem:[%s77] sm:$0x1]
    %79 = vrot.lane.b32.xlu0 %v78, 24
    %v80 = vpop.permute.xlu0 %79
    %vm81 = vcmask 261312
    %82 = vst.msk [vmem:[#allocation0] sm:$0x1] %vm81, %v80
    %s83 = scalar_lea.vmem %s0, 2
    %v84 = vld [vmem:[%s83] sm:$0x1]
    %85 = vrot.lane.b32.xlu0 %v84, 16
    %v86 = vpop.permute.xlu0 %85
    %vm87 = vcmask 195712
    %88 = vst.msk [vmem:[#allocation0] sm:$0x1] %vm87, %v86
    %s89 = scalar_lea.vmem %s0, 1
    %v90 = vld [vmem:[%s89] sm:$0x1]
    %91 = vrot.lane.b32.xlu0 %v90, 8
    %v92 = vpop.permute.xlu0 %91
    %vm93 = vcmask 130112
    %94 = vst.msk [vmem:[#allocation0] sm:$0x1] %vm93, %v92
    %s96 = sshllo.u32 0, 1
    %v98 = vld [vmem:[#allocation0] sm:%s96]
    %s99 = sshllo.u32 0, 1
    %100 = vst [vmem:[%s1] sm:%s99] %v98

// kernel: residual_forward.1
$region0: #{residual_forward.1}
  #allocation0 [shape = 'u32[]', space=smem, size = 0x4, offset = 0x4, fixed_abs, tag = 'smem constant byte address 0x4 - core index']
  #allocation1 [shape = 'u32[144,128]{1,0:T(1,128)}', space=vmem, size = 0x12000, scoped, tag = 'internal scratch']
  %s0 = inlined_call_operand.vmem [shape: f32[2,16,128], index: 0, kind: input, shape index: {}]
  %s1 = inlined_call_operand.vmem [shape: f32[3,128,128], index: 1, kind: input, shape index: {}]
  %s2 = inlined_call_operand.vmem [shape: f32[1,128], index: 2, kind: input, shape index: {}]
  %s3 = inlined_call_operand.vmem [shape: f32[1,128], index: 3, kind: input, shape index: {}]
  %s4 = inlined_call_operand.vmem [shape: f32[1,128], index: 4, kind: input, shape index: {}]
  %s5 = inlined_call_operand.vmem [shape: f32[3,128,128], index: 5, kind: input, shape index: {}]
  %s6 = inlined_call_operand.vmem [shape: f32[1,128], index: 6, kind: input, shape index: {}]
  %s7 = inlined_call_operand.vmem [shape: f32[1,128], index: 7, kind: input, shape index: {}]
  %s8 = inlined_call_operand.vmem [shape: f32[1,128], index: 8, kind: input, shape index: {}]
  %s9 = inlined_call_operand.vmem [shape: f32[128,128], index: 9, kind: input, shape index: {}]
  %s10 = inlined_call_operand.vmem [shape: f32[2,16,128], index: 10, kind: output, shape index: {}]
  %s11 = sld [smem:[#allocation0]]
  $region50: #{residual_forward.1} parent=0
    _
  %s13 = ssub.s32 1, %s11
  %s14 = scalar_select 0, %s13, %s11
  // Predicated region
  $region2: #{residual_forward.1} parent=0 // pred_check
    _
  $region3: #{residual_forward.1} parent=0 // pred_check_branch
    %16 = sbr.rel (0) target = $region5
  $region4: #{residual_forward.1} parent=0 // pred_region
    _
  $region5: #{residual_forward.1} parent=0 // pred_fallthru
    _
  // Predicated region
  $region6: #{residual_forward.1} parent=0 // pred_check
    _
  $region7: #{residual_forward.1} parent=0 // pred_check_branch
    %18 = sbr.rel (0) target = $region9
  $region8: #{residual_forward.1} parent=0 // pred_region
    _
  $region9: #{residual_forward.1} parent=0 // pred_fallthru
    _
  // Predicated region
  $region10: #{residual_forward.1} parent=0 // pred_check
    _
  $region11: #{residual_forward.1} parent=0 // pred_check_branch
    %20 = sbr.rel (0) target = $region13
  $region12: #{residual_forward.1} parent=0 // pred_region
    _
  $region13: #{residual_forward.1} parent=0 // pred_fallthru
    _
  // Predicated region
  $region14: #{residual_forward.1} parent=0 // pred_check
    _
  $region15: #{residual_forward.1} parent=0 // pred_check_branch
    %22 = sbr.rel (0) target = $region17
  $region16: #{residual_forward.1} parent=0 // pred_region
    _
  $region17: #{residual_forward.1} parent=0 // pred_fallthru
    _
  // Predicated region
  $region18: #{residual_forward.1} parent=0 // pred_check
    _
  $region19: #{residual_forward.1} parent=0 // pred_check_branch
    %24 = sbr.rel (0) target = $region21
  $region20: #{residual_forward.1} parent=0 // pred_region
    _
  $region21: #{residual_forward.1} parent=0 // pred_fallthru
    _
  // Predicated region
  $region22: #{residual_forward.1} parent=0 // pred_check
    _
  $region23: #{residual_forward.1} parent=0 // pred_check_branch
    %26 = sbr.rel (0) target = $region25
  $region24: #{residual_forward.1} parent=0 // pred_region
    _
  $region25: #{residual_forward.1} parent=0 // pred_fallthru
    _
  // Predicated region
  $region26: #{residual_forward.1} parent=0 // pred_check
    _
  $region27: #{residual_forward.1} parent=0 // pred_check_branch
    %28 = sbr.rel (0) target = $region29
  $region28: #{residual_forward.1} parent=0 // pred_region
    _
  $region29: #{residual_forward.1} parent=0 // pred_fallthru
    _
  // Predicated region
  $region30: #{residual_forward.1} parent=0 // pred_check
    _
  $region31: #{residual_forward.1} parent=0 // pred_check_branch
    %30 = sbr.rel (0) target = $region33
  $region32: #{residual_forward.1} parent=0 // pred_region
    _
  $region33: #{residual_forward.1} parent=0 // pred_fallthru
    _
  // Predicated region
  $region34: #{residual_forward.1} parent=0 // pred_check
    _
  $region35: #{residual_forward.1} parent=0 // pred_check_branch
    %32 = sbr.rel (0) target = $region37
  $region36: #{residual_forward.1} parent=0 // pred_region
    _
  $region37: #{residual_forward.1} parent=0 // pred_fallthru
    _
  // Predicated region
  $region38: #{residual_forward.1} parent=0 // pred_check
    _
  $region39: #{residual_forward.1} parent=0 // pred_check_branch
    %34 = sbr.rel (0) target = $region41
  $region40: #{residual_forward.1} parent=0 // pred_region
    _
  $region41: #{residual_forward.1} parent=0 // pred_fallthru
    _
  %v35 = vld [vmem:[%s0] sm:$0xff]
  %v36 = vld [vmem:[%s0 + $0x8] sm:$0xff]
  %v37 = vld [vmem:[%s0 + $0x10] sm:$0xff]
  %v38 = vld [vmem:[%s0 + $0x18] sm:$0xff]
  %v39 = vlaneseq
  %v40 = vshrl.u32 %v39, 7
  %v41 = vadd.s32 %v40, 8
  %v42 = vadd.s32 %v40, 16
  %v43 = vadd.s32 %v40, 24
  %vm44 = vcmp.lt.s32.totalorder %v40, 0
  %v45 = vsub.s32 0, %v40
  %v46 = vsel %vm44, %v45, %v40
  %v47 = vshrl.u32 %v46, 4
  %v48 = vand.u32 %v46, 15
  %v49 = vsub.s32 0, %v48
  %v50 = vsel %vm44, %v49, %v48
  %vm51 = vcmp.lt.s32.totalorder %v41, 0
  %v52 = vsub.s32 0, %v41
  %v53 = vsel %vm51, %v52, %v41
  %v54 = vshrl.u32 %v53, 4
  %v55 = vand.u32 %v53, 15
  %v56 = vsub.s32 0, %v55
  %v57 = vsel %vm51, %v56, %v55
  %vm58 = vcmp.lt.s32.totalorder %v42, 0
  %v59 = vsub.s32 0, %v42
  %v60 = vsel %vm58, %v59, %v42
  %v61 = vshrl.u32 %v60, 4
  %v62 = vand.u32 %v60, 15
  %v63 = vsub.s32 0, %v62
  %v64 = vsel %vm58, %v63, %v62
  %vm65 = vcmp.lt.s32.totalorder %v43, 0
  %v66 = vsub.s32 0, %v43
  %v67 = vsel %vm65, %v66, %v43
  %v68 = vshrl.u32 %v67, 4
  %v69 = vand.u32 %v67, 15
  %v70 = vsub.s32 0, %v69
  %v71 = vsel %vm65, %v70, %v69
  %vm72 = vcmp.ne.s32.totalorder %v50, 0
  %vm73 = vcmp.ne.s32.totalorder %v57, 0
  %vm74 = vcmp.ne.s32.totalorder %v64, 0
  %vm75 = vcmp.ne.s32.totalorder %v71, 0
  %vm76 = vcmp.lt.s32.totalorder %v50, 0
  %vm77 = vcmp.lt.s32.totalorder %v57, 0
  %vm78 = vcmp.lt.s32.totalorder %v64, 0
  %vm79 = vcmp.lt.s32.totalorder %v71, 0
  %vm80 = vmand %vm76, %vm72
  %vm81 = vmand %vm77, %vm73
  %vm82 = vmand %vm78, %vm74
  %vm83 = vmand %vm79, %vm75
  %v84 = vadd.s32 %v50, 16
  %v85 = vadd.s32 %v57, 16
  %v86 = vadd.s32 %v64, 16
  %v87 = vadd.s32 %v71, 16
  %v88 = vsel %vm80, %v84, %v50
  %v89 = vsel %vm81, %v85, %v57
  %v90 = vsel %vm82, %v86, %v64
  %v91 = vsel %vm83, %v87, %v71
  %vm92 = vcmp.eq.s32.totalorder %v88, 0
  %vm93 = vcmp.eq.s32.totalorder %v89, 0
  %vm94 = vcmp.eq.s32.totalorder %v90, 0
  %vm95 = vcmp.eq.s32.totalorder %v91, 0
  %vm96 = vcmp.eq.s32.totalorder %v88, 15
  %vm97 = vcmp.eq.s32.totalorder %v89, 15
  %vm98 = vcmp.eq.s32.totalorder %v90, 15
  %vm99 = vcmp.eq.s32.totalorder %v91, 15
  %v100 = vrot.slane %v35, 7
  %v101 = vrot.slane %v36, 7
  %v102 = vrot.slane %v37, 7
  %v103 = vrot.slane %v38, 7
  %vm104 = vcmp.lt.s32.totalorder %v40, 1
  %v105 = vsel %vm104, %v102, %v103
  %v106 = vsel %vm104, %v101, %v102
  %v107 = vsel %vm104, %v100, %v101
  %v108 = vsel %vm104, %v103, %v100
  %v109 = vrot.slane %v35, 1
  %v110 = vrot.slane %v36, 1
  %v111 = vrot.slane %v37, 1
  %v112 = vrot.slane %v38, 1
  %vm113 = vcmp.lt.s32.totalorder %v40, 7
  %v114 = vsel %vm113, %v111, %v112
  %v115 = vsel %vm113, %v110, %v111
  %v116 = vsel %vm113, %v109, %v110
  %v117 = vsel %vm113, %v112, %v109
  %v118 = vsel %vm92, %v116, %v108
  %v119 = vsel %vm93, %v115, %v107
  %v120 = vsel %vm94, %v114, %v106
  %v121 = vsel %vm95, %v117, %v105
  %v122 = vsel %vm96, %v108, %v116
  %v123 = vsel %vm97, %v107, %v115
  %v124 = vsel %vm98, %v106, %v114
  %v125 = vsel %vm99, %v105, %v117
  %v126 = vld [vmem:[%s1] sm:$0xff]
  %v127 = vld [vmem:[%s1 + $0x8] sm:$0xff]
  %v128 = vld [vmem:[%s1 + $0x10] sm:$0xff]
  %v129 = vld [vmem:[%s1 + $0x18] sm:$0xff]
  %v130 = vld [vmem:[%s1 + $0x20] sm:$0xff]
  %v131 = vld [vmem:[%s1 + $0x28] sm:$0xff]
  %v132 = vld [vmem:[%s1 + $0x30] sm:$0xff]
  %v133 = vld [vmem:[%s1 + $0x38] sm:$0xff]
  %v134 = vld [vmem:[%s1 + $0x40] sm:$0xff]
  %v135 = vld [vmem:[%s1 + $0x48] sm:$0xff]
  %v136 = vld [vmem:[%s1 + $0x50] sm:$0xff]
  %v137 = vld [vmem:[%s1 + $0x58] sm:$0xff]
  %v138 = vld [vmem:[%s1 + $0x60] sm:$0xff]
  %v139 = vld [vmem:[%s1 + $0x68] sm:$0xff]
  %v140 = vld [vmem:[%s1 + $0x70] sm:$0xff]
  %v141 = vld [vmem:[%s1 + $0x78] sm:$0xff]
  %s142 = scalar_lea.vmem %s1, 128
  %v143 = vld [vmem:[%s142] sm:$0xff]
  %v144 = vld [vmem:[%s142 + $0x8] sm:$0xff]
  %v145 = vld [vmem:[%s142 + $0x10] sm:$0xff]
  %v146 = vld [vmem:[%s142 + $0x18] sm:$0xff]
  %v147 = vld [vmem:[%s142 + $0x20] sm:$0xff]
  %v148 = vld [vmem:[%s142 + $0x28] sm:$0xff]
  %v149 = vld [vmem:[%s142 + $0x30] sm:$0xff]
  %v150 = vld [vmem:[%s142 + $0x38] sm:$0xff]
  %v151 = vld [vmem:[%s142 + $0x40] sm:$0xff]
  %v152 = vld [vmem:[%s142 + $0x48] sm:$0xff]
  %v153 = vld [vmem:[%s142 + $0x50] sm:$0xff]
  %v154 = vld [vmem:[%s142 + $0x58] sm:$0xff]
  %v155 = vld [vmem:[%s142 + $0x60] sm:$0xff]
  %v156 = vld [vmem:[%s142 + $0x68] sm:$0xff]
  %v157 = vld [vmem:[%s142 + $0x70] sm:$0xff]
  %v158 = vld [vmem:[%s142 + $0x78] sm:$0xff]
  %159 = vmatprep.subr.mxu0 0.0
  %160 = vmatpush1.msra.mxu0 %v143
  %161 = vmatprep.subr.mxu0 0.0
  %162 = vmatpush1.msra.mxu0 %v144
  %163 = vmatprep.subr.mxu0 0.0
  %164 = vmatpush1.msra.mxu0 %v145
  %165 = vmatprep.subr.mxu0 0.0
  %166 = vmatpush1.msra.mxu0 %v146
  %167 = vmatprep.subr.mxu0 0.0
  %168 = vmatpush1.msra.mxu0 %v147
  %169 = vmatprep.subr.mxu0 0.0
  %170 = vmatpush1.msra.mxu0 %v148
  %171 = vmatprep.subr.mxu0 0.0
  %172 = vmatpush1.msra.mxu0 %v149
  %173 = vmatprep.subr.mxu0 0.0
  %174 = vmatpush1.msra.mxu0 %v150
  %175 = vmatprep.subr.mxu0 0.0
  %176 = vmatpush1.msra.mxu0 %v151
  %177 = vmatprep.subr.mxu0 0.0
  %178 = vmatpush1.msra.mxu0 %v152
  %179 = vmatprep.subr.mxu0 0.0
  %180 = vmatpush1.msra.mxu0 %v153
  %181 = vmatprep.subr.mxu0 0.0
  %182 = vmatpush1.msra.mxu0 %v154
  %183 = vmatprep.subr.mxu0 0.0
  %184 = vmatpush1.msra.mxu0 %v155
  %185 = vmatprep.subr.mxu0 0.0
  %186 = vmatpush1.msra.mxu0 %v156
  %187 = vmatprep.subr.mxu0 0.0
  %188 = vmatpush1.msra.mxu0 %v157
  %189 = vmatprep.subr.mxu0 0.0
  %190 = vmatpush1.msra.mxu0 %v158
  %191 = vmatprep.subr.mxu0 0.0
  %192 = vmatpush1.msra.mxu0 0.0
  %193 = vmatprep.subr.mxu0 0.0
  %194 = vmatpush1.msra.mxu0 0.0
  %195 = vmatprep.subr.mxu0 0.0
  %196 = vmatpush1.msra.mxu0 0.0
  %197 = vmatprep.subr.mxu0 0.0
  %198 = vmatpush1.msra.mxu0 0.0
  %199 = vmatprep.subr.mxu0 0.0
  %200 = vmatpush1.msra.mxu0 0.0
  %201 = vmatprep.subr.mxu0 0.0
  %202 = vmatpush1.msra.mxu0 0.0
  %203 = vmatprep.subr.mxu0 0.0
  %204 = vmatpush1.msra.mxu0 0.0
  %205 = vmatprep.subr.mxu0 0.0
  %206 = vmatpush1.msra.mxu0 0.0
  %207 = vmatprep.subr.mxu0 0.0
  %208 = vmatpush1.msra.mxu0 0.0
  %209 = vmatprep.subr.mxu0 0.0
  %210 = vmatpush1.msra.mxu0 0.0
  %211 = vmatprep.subr.mxu0 0.0
  %212 = vmatpush1.msra.mxu0 0.0
  %213 = vmatprep.subr.mxu0 0.0
  %214 = vmatpush1.msra.mxu0 0.0
  %215 = vmatprep.subr.mxu0 0.0
  %216 = vmatpush1.msra.mxu0 0.0
  %217 = vmatprep.subr.mxu0 0.0
  %218 = vmatpush1.msra.mxu0 0.0
  %219 = vmatprep.subr.mxu0 0.0
  %220 = vmatpush1.msra.mxu0 0.0
  %221 = vmatprep.subr.mxu0 0.0
  %222 = vmatpush1.msra.mxu0 0.0
  %223 = vmatprep.mubr.f32.mxu0 0.0
  %224 = vmatmul.mubr.f32.gmra.mrb[0].mxu0 %v35
  %v225 = vpop.f32.mrb[0].mxu0
  %v226 = vadd.f32 0.0, %v225
  %v227 = vpop.f32.mrb[0].mxu0
  %228 = vmatprep.mubr.f32.mxu0 0.0
  %229 = vmatmul.mubr.f32.gmra.mrb[0].mxu0 %v36
  %v230 = vpop.f32.mrb[0].mxu0
  %v231 = vadd.f32 0.0, %v230
  %v232 = vpop.f32.mrb[0].mxu0
  %233 = vmatprep.mubr.f32.mxu0 0.0
  %234 = vmatmul.mubr.f32.gmra.mrb[0].mxu0 %v37
  %v235 = vpop.f32.mrb[0].mxu0
  %v236 = vadd.f32 0.0, %v235
  %v237 = vpop.f32.mrb[0].mxu0
  %238 = vmatprep.mubr.f32.mxu0 0.0
  %239 = vmatmul.mubr.f32.gmra.mrb[0].mxu0 %v38
  %v240 = vpop.f32.mrb[0].mxu0
  %v241 = vadd.f32 0.0, %v240
  %v242 = vpop.f32.mrb[0].mxu0
  %243 = vdwg.mxu0
  %244 = vmatprep.subr.mxu0 0.0
  %245 = vmatpush1.msra.mxu0 %v126
  %246 = vmatprep.subr.mxu0 0.0
  %247 = vmatpush1.msra.mxu0 %v127
  %248 = vmatprep.subr.mxu0 0.0
  %249 = vmatpush1.msra.mxu0 %v128
  %250 = vmatprep.subr.mxu0 0.0
  %251 = vmatpush1.msra.mxu0 %v129
  %252 = vmatprep.subr.mxu0 0.0
  %253 = vmatpush1.msra.mxu0 %v130
  %254 = vmatprep.subr.mxu0 0.0
  %255 = vmatpush1.msra.mxu0 %v131
  %256 = vmatprep.subr.mxu0 0.0
  %257 = vmatpush1.msra.mxu0 %v132
  %258 = vmatprep.subr.mxu0 0.0
  %259 = vmatpush1.msra.mxu0 %v133
  %260 = vmatprep.subr.mxu0 0.0
  %261 = vmatpush1.msra.mxu0 %v134
  %262 = vmatprep.subr.mxu0 0.0
  %263 = vmatpush1.msra.mxu0 %v135
  %264 = vmatprep.subr.mxu0 0.0
  %265 = vmatpush1.msra.mxu0 %v136
  %266 = vmatprep.subr.mxu0 0.0
  %267 = vmatpush1.msra.mxu0 %v137
  %268 = vmatprep.subr.mxu0 0.0
  %269 = vmatpush1.msra.mxu0 %v138
  %270 = vmatprep.subr.mxu0 0.0
  %271 = vmatpush1.msra.mxu0 %v139
  %272 = vmatprep.subr.mxu0 0.0
  %273 = vmatpush1.msra.mxu0 %v140
  %274 = vmatprep.subr.mxu0 0.0
  %275 = vmatpush1.msra.mxu0 %v141
  %276 = vmatprep.subr.mxu0 0.0
  %277 = vmatpush1.msra.mxu0 0.0
  %278 = vmatprep.subr.mxu0 0.0
  %279 = vmatpush1.msra.mxu0 0.0
  %280 = vmatprep.subr.mxu0 0.0
  %281 = vmatpush1.msra.mxu0 0.0
  %282 = vmatprep.subr.mxu0 0.0
  %283 = vmatpush1.msra.mxu0 0.0
  %284 = vmatprep.subr.mxu0 0.0
  %285 = vmatpush1.msra.mxu0 0.0
  %286 = vmatprep.subr.mxu0 0.0
  %287 = vmatpush1.msra.mxu0 0.0
  %288 = vmatprep.subr.mxu0 0.0
  %289 = vmatpush1.msra.mxu0 0.0
  %290 = vmatprep.subr.mxu0 0.0
  %291 = vmatpush1.msra.mxu0 0.0
  %292 = vmatprep.subr.mxu0 0.0
  %293 = vmatpush1.msra.mxu0 0.0
  %294 = vmatprep.subr.mxu0 0.0
  %295 = vmatpush1.msra.mxu0 0.0
  %296 = vmatprep.subr.mxu0 0.0
  %297 = vmatpush1.msra.mxu0 0.0
  %298 = vmatprep.subr.mxu0 0.0
  %299 = vmatpush1.msra.mxu0 0.0
  %300 = vmatprep.subr.mxu0 0.0
  %301 = vmatpush1.msra.mxu0 0.0
  %302 = vmatprep.subr.mxu0 0.0
  %303 = vmatpush1.msra.mxu0 0.0
  %304 = vmatprep.subr.mxu0 0.0
  %305 = vmatpush1.msra.mxu0 0.0
  %306 = vmatprep.subr.mxu0 0.0
  %307 = vmatpush1.msra.mxu0 0.0
  %308 = vmatprep.mubr.f32.mxu0 0.0
  %309 = vmatmul.mubr.f32.gmra.mrb[0].mxu0 %v118
  %v310 = vpop.f32.mrb[0].mxu0
  %v311 = vadd.f32 %v226, %v310
  %v312 = vpop.f32.mrb[0].mxu0
  %313 = vmatprep.mubr.f32.mxu0 0.0
  %314 = vmatmul.mubr.f32.gmra.mrb[0].mxu0 %v119
  %v315 = vpop.f32.mrb[0].mxu0
  %v316 = vadd.f32 %v231, %v315
  %v317 = vpop.f32.mrb[0].mxu0
  %318 = vmatprep.mubr.f32.mxu0 0.0
  %319 = vmatmul.mubr.f32.gmra.mrb[0].mxu0 %v120
  %v320 = vpop.f32.mrb[0].mxu0
  %v321 = vadd.f32 %v236, %v320
  %v322 = vpop.f32.mrb[0].mxu0
  %323 = vmatprep.mubr.f32.mxu0 0.0
  %324 = vmatmul.mubr.f32.gmra.mrb[0].mxu0 %v121
  %v325 = vpop.f32.mrb[0].mxu0
  %v326 = vadd.f32 %v241, %v325
  %v327 = vpop.f32.mrb[0].mxu0
  %328 = vdwg.mxu0
  %s329 = scalar_lea.vmem %s1, 256
  %v330 = vld [vmem:[%s329] sm:$0xff]
  %v331 = vld [vmem:[%s329 + $0x8] sm:$0xff]
  %v332 = vld [vmem:[%s329 + $0x10] sm:$0xff]
  %v333 = vld [vmem:[%s329 + $0x18] sm:$0xff]
  %v334 = vld [vmem:[%s329 + $0x20] sm:$0xff]
  %v335 = vld [vmem:[%s329 + $0x28] sm:$0xff]
  %v336 = vld [vmem:[%s329 + $0x30] sm:$0xff]
  %v337 = vld [vmem:[%s329 + $0x38] sm:$0xff]
  %v338 = vld [vmem:[%s329 + $0x40] sm:$0xff]
  %v339 = vld [vmem:[%s329 + $0x48] sm:$0xff]
  %v340 = vld [vmem:[%s329 + $0x50] sm:$0xff]
  %v341 = vld [vmem:[%s329 + $0x58] sm:$0xff]
  %v342 = vld [vmem:[%s329 + $0x60] sm:$0xff]
  %v343 = vld [vmem:[%s329 + $0x68] sm:$0xff]
  %v344 = vld [vmem:[%s329 + $0x70] sm:$0xff]
  %v345 = vld [vmem:[%s329 + $0x78] sm:$0xff]
  %346 = vmatprep.subr.mxu0 0.0
  %347 = vmatpush1.msra.mxu0 %v330
  %348 = vmatprep.subr.mxu0 0.0
  %349 = vmatpush1.msra.mxu0 %v331
  %350 = vmatprep.subr.mxu0 0.0
  %351 = vmatpush1.msra.mxu0 %v332
  %352 = vmatprep.subr.mxu0 0.0
  %353 = vmatpush1.msra.mxu0 %v333
  %354 = vmatprep.subr.mxu0 0.0
  %355 = vmatpush1.msra.mxu0 %v334
  %356 = vmatprep.subr.mxu0 0.0
  %357 = vmatpush1.msra.mxu0 %v335
  %358 = vmatprep.subr.mxu0 0.0
  %359 = vmatpush1.msra.mxu0 %v336
  %360 = vmatprep.subr.mxu0 0.0
  %361 = vmatpush1.msra.mxu0 %v337
  %362 = vmatprep.subr.mxu0 0.0
  %363 = vmatpush1.msra.mxu0 %v338
  %364 = vmatprep.subr.mxu0 0.0
  %365 = vmatpush1.msra.mxu0 %v339
  %366 = vmatprep.subr.mxu0 0.0
  %367 = vmatpush1.msra.mxu0 %v340
  %368 = vmatprep.subr.mxu0 0.0
  %369 = vmatpush1.msra.mxu0 %v341
  %370 = vmatprep.subr.mxu0 0.0
  %371 = vmatpush1.msra.mxu0 %v342
  %372 = vmatprep.subr.mxu0 0.0
  %373 = vmatpush1.msra.mxu0 %v343
  %374 = vmatprep.subr.mxu0 0.0
  %375 = vmatpush1.msra.mxu0 %v344
  %376 = vmatprep.subr.mxu0 0.0
  %377 = vmatpush1.msra.mxu0 %v345
  %378 = vmatprep.subr.mxu0 0.0
  %379 = vmatpush1.msra.mxu0 0.0
  %380 = vmatprep.subr.mxu0 0.0
  %381 = vmatpush1.msra.mxu0 0.0
  %382 = vmatprep.subr.mxu0 0.0
  %383 = vmatpush1.msra.mxu0 0.0
  %384 = vmatprep.subr.mxu0 0.0
  %385 = vmatpush1.msra.mxu0 0.0
  %386 = vmatprep.subr.mxu0 0.0
  %387 = vmatpush1.msra.mxu0 0.0
  %388 = vmatprep.subr.mxu0 0.0
  %389 = vmatpush1.msra.mxu0 0.0
  %390 = vmatprep.subr.mxu0 0.0
  %391 = vmatpush1.msra.mxu0 0.0
  %392 = vmatprep.subr.mxu0 0.0
  %393 = vmatpush1.msra.mxu0 0.0
  %394 = vmatprep.subr.mxu0 0.0
  %395 = vmatpush1.msra.mxu0 0.0
  %396 = vmatprep.subr.mxu0 0.0
  %397 = vmatpush1.msra.mxu0 0.0
  %398 = vmatprep.subr.mxu0 0.0
  %399 = vmatpush1.msra.mxu0 0.0
  %400 = vmatprep.subr.mxu0 0.0
  %401 = vmatpush1.msra.mxu0 0.0
  %402 = vmatprep.subr.mxu0 0.0
  %403 = vmatpush1.msra.mxu0 0.0
  %404 = vmatprep.subr.mxu0 0.0
  %405 = vmatpush1.msra.mxu0 0.0
  %406 = vmatprep.subr.mxu0 0.0
  %407 = vmatpush1.msra.mxu0 0.0
  %408 = vmatprep.subr.mxu0 0.0
  %409 = vmatpush1.msra.mxu0 0.0
  %410 = vmatprep.mubr.f32.mxu0 0.0
  %411 = vmatmul.mubr.f32.gmra.mrb[0].mxu0 %v122
  %v412 = vpop.f32.mrb[0].mxu0
  %v413 = vadd.f32 0.0, %v412
  %v414 = vpop.f32.mrb[0].mxu0
  %415 = vmatprep.mubr.f32.mxu0 0.0
  %416 = vmatmul.mubr.f32.gmra.mrb[0].mxu0 %v123
  %v417 = vpop.f32.mrb[0].mxu0
  %v418 = vadd.f32 0.0, %v417
  %v419 = vpop.f32.mrb[0].mxu0
  %420 = vmatprep.mubr.f32.mxu0 0.0
  %421 = vmatmul.mubr.f32.gmra.mrb[0].mxu0 %v124
  %v422 = vpop.f32.mrb[0].mxu0
  %v423 = vadd.f32 0.0, %v422
  %v424 = vpop.f32.mrb[0].mxu0
  %425 = vmatprep.mubr.f32.mxu0 0.0
  %426 = vmatmul.mubr.f32.gmra.mrb[0].mxu0 %v125
  %v427 = vpop.f32.mrb[0].mxu0
  %v428 = vadd.f32 0.0, %v427
  %v429 = vpop.f32.mrb[0].mxu0
  %430 = vdwg.mxu0
  %v431 = vadd.f32 %v311, %v413
  %v432 = vadd.f32 %v316, %v418
  %v433 = vadd.f32 %v321, %v423
  %v434 = vadd.f32 %v326, %v428
  %v435 = vld [vmem:[%s2] sm:$0x1]
  %v437 = vlaneseq
  %v438 = vshrl.u32 %v437, 7
  %v439 = vsub.s32 0, %v438
  %v440 = vrot.slane %v435, %v439
  %v442 = vadd.f32 %v431, %v440
  %v443 = vadd.f32 %v432, %v440
  %v444 = vadd.f32 %v433, %v440
  %v445 = vadd.f32 %v434, %v440
  %v446 = vmul.f32 %v442, %v442
  %v447 = vmul.f32 %v443, %v443
  %v448 = vmul.f32 %v444, %v444
  %v449 = vmul.f32 %v445, %v445
  %v450 = vadd.f32 %v442, %v443
  %v451 = vrot.slane %v450, 4
  %v452 = vadd.f32 %v450, %v451
  %v453 = vrot.slane %v452, 2
  %v454 = vadd.f32 %v452, %v453
  %v455 = vrot.slane %v454, 1
  %v456 = vadd.f32 %v454, %v455
  %v457 = vadd.f32 %v444, %v445
  %v458 = vrot.slane %v457, 4
  %v459 = vadd.f32 %v457, %v458
  %v460 = vrot.slane %v459, 2
  %v461 = vadd.f32 %v459, %v460
  %v462 = vrot.slane %v461, 1
  %v463 = vadd.f32 %v461, %v462
  %v464 = vadd.f32 %v446, %v447
  %v465 = vrot.slane %v464, 4
  %v466 = vadd.f32 %v464, %v465
  %v467 = vrot.slane %v466, 2
  %v468 = vadd.f32 %v466, %v467
  %v469 = vrot.slane %v468, 1
  %v470 = vadd.f32 %v468, %v469
  %v471 = vadd.f32 %v448, %v449
  %v472 = vrot.slane %v471, 4
  %v473 = vadd.f32 %v471, %v472
  %v474 = vrot.slane %v473, 2
  %v475 = vadd.f32 %v473, %v474
  %v476 = vrot.slane %v475, 1
  %v477 = vadd.f32 %v475, %v476
  %vm478 = vcmask 1040384
  %v479 = vsel %vm478, %v456, %v463
  %vm480 = vcmask 1041408
  %v481 = vsel %vm480, %v479, %v470
  %vm482 = vcmask 1042432
  %v483 = vsel %vm482, %v481, %v477
  %v484 = vld [vmem:[%s9] sm:$0xff]
  %v485 = vld [vmem:[%s9 + $0x8] sm:$0xff]
  %v486 = vld [vmem:[%s9 + $0x10] sm:$0xff]
  %v487 = vld [vmem:[%s9 + $0x18] sm:$0xff]
  %v488 = vld [vmem:[%s9 + $0x20] sm:$0xff]
  %v489 = vld [vmem:[%s9 + $0x28] sm:$0xff]
  %v490 = vld [vmem:[%s9 + $0x30] sm:$0xff]
  %v491 = vld [vmem:[%s9 + $0x38] sm:$0xff]
  %v492 = vld [vmem:[%s9 + $0x40] sm:$0xff]
  %v493 = vld [vmem:[%s9 + $0x48] sm:$0xff]
  %v494 = vld [vmem:[%s9 + $0x50] sm:$0xff]
  %v495 = vld [vmem:[%s9 + $0x58] sm:$0xff]
  %v496 = vld [vmem:[%s9 + $0x60] sm:$0xff]
  %v497 = vld [vmem:[%s9 + $0x68] sm:$0xff]
  %v498 = vld [vmem:[%s9 + $0x70] sm:$0xff]
  %v499 = vld [vmem:[%s9 + $0x78] sm:$0xff]
  %500 = vmatprep.subr.mxu0 0.0
  %501 = vmatpush1.msra.mxu0 %v484
  %502 = vmatprep.subr.mxu0 0.0
  %503 = vmatpush1.msra.mxu0 %v485
  %504 = vmatprep.subr.mxu0 0.0
  %505 = vmatpush1.msra.mxu0 %v486
  %506 = vmatprep.subr.mxu0 0.0
  %507 = vmatpush1.msra.mxu0 %v487
  %508 = vmatprep.subr.mxu0 0.0
  %509 = vmatpush1.msra.mxu0 %v488
  %510 = vmatprep.subr.mxu0 0.0
  %511 = vmatpush1.msra.mxu0 %v489
  %512 = vmatprep.subr.mxu0 0.0
  %513 = vmatpush1.msra.mxu0 %v490
  %514 = vmatprep.subr.mxu0 0.0
  %515 = vmatpush1.msra.mxu0 %v491
  %516 = vmatprep.subr.mxu0 0.0
  %517 = vmatpush1.msra.mxu0 %v492
  %518 = vmatprep.subr.mxu0 0.0
  %519 = vmatpush1.msra.mxu0 %v493
  %520 = vmatprep.subr.mxu0 0.0
  %521 = vmatpush1.msra.mxu0 %v494
  %522 = vmatprep.subr.mxu0 0.0
  %523 = vmatpush1.msra.mxu0 %v495
  %524 = vmatprep.subr.mxu0 0.0
  %525 = vmatpush1.msra.mxu0 %v496
  %526 = vmatprep.subr.mxu0 0.0
  %527 = vmatpush1.msra.mxu0 %v497
  %528 = vmatprep.subr.mxu0 0.0
  %529 = vmatpush1.msra.mxu0 %v498
  %530 = vmatprep.subr.mxu0 0.0
  %531 = vmatpush1.msra.mxu0 %v499
  %532 = vmatprep.subr.mxu0 0.0
  %533 = vmatpush1.msra.mxu0 0.0
  %534 = vmatprep.subr.mxu0 0.0
  %535 = vmatpush1.msra.mxu0 0.0
  %536 = vmatprep.subr.mxu0 0.0
  %537 = vmatpush1.msra.mxu0 0.0
  %538 = vmatprep.subr.mxu0 0.0
  %539 = vmatpush1.msra.mxu0 0.0
  %540 = vmatprep.subr.mxu0 0.0
  %541 = vmatpush1.msra.mxu0 0.0
  %542 = vmatprep.subr.mxu0 0.0
  %543 = vmatpush1.msra.mxu0 0.0
  %544 = vmatprep.subr.mxu0 0.0
  %545 = vmatpush1.msra.mxu0 0.0
  %546 = vmatprep.subr.mxu0 0.0
  %547 = vmatpush1.msra.mxu0 0.0
  %548 = vmatprep.subr.mxu0 0.0
  %549 = vmatpush1.msra.mxu0 0.0
  %550 = vmatprep.subr.mxu0 0.0
  %551 = vmatpush1.msra.mxu0 0.0
  %552 = vmatprep.subr.mxu0 0.0
  %553 = vmatpush1.msra.mxu0 0.0
  %554 = vmatprep.subr.mxu0 0.0
  %555 = vmatpush1.msra.mxu0 0.0
  %556 = vmatprep.subr.mxu0 0.0
  %557 = vmatpush1.msra.mxu0 0.0
  %558 = vmatprep.subr.mxu0 0.0
  %559 = vmatpush1.msra.mxu0 0.0
  %560 = vmatprep.subr.mxu0 0.0
  %561 = vmatpush1.msra.mxu0 0.0
  %562 = vmatprep.subr.mxu0 0.0
  %563 = vmatpush1.msra.mxu0 0.0
  %564 = vmatprep.mubr.f32.mxu0 0.0
  %565 = vmatmul.mubr.f32.gmra.mrb[0].mxu0 %v483
  %v566 = vpop.f32.mrb[0].mxu0
  %v567 = vadd.f32 0.0, %v566
  %v568 = vpop.f32.mrb[0].mxu0
  %569 = vdwg.mxu0
  %v570 = vmul.f32 %v567, %v567
  %v572 = vrot.slane %v570, 6
  %v574 = vsub.f32 %v567, %v572
  %v575 = vld [vmem:[%s3] sm:$0x1]
  %v576 = vadd.f32 %v574, 1e-05
  %v577 = vrsqrt.pop %v576
  %v579 = vlaneseq
  %v580 = vshrl.u32 %v579, 7
  %v581 = vsub.s32 0, %v580
  %v582 = vrot.slane %v575, %v581
  %v584 = vmul.f32 %v582, %v577
  %v585 = vld [vmem:[%s4] sm:$0x1]
  %v587 = vrot.slane %v584, 2
  %v589 = vmul.f32 %v567, %v587
  %v591 = vlaneseq
  %v592 = vshrl.u32 %v591, 7
  %v593 = vsub.s32 0, %v592
  %v594 = vrot.slane %v585, %v593
  %v596 = vsub.f32 %v594, %v589
  %v598 = vunpack.c.l.s4 1966171168
  %v599 = vunpack.c.0.s8 %v598
  %v600 = vlaneseq
  %v601 = vshrl.u32 %v600, 7
  %v602 = vsub.s32 %v599, %v601
  %v603 = vrot.slane %v584, %v602
  %v604 = vcombine.high %v603, %v603
  %v606 = vunpack.c.l.s4 1966171168
  %v607 = vunpack.c.0.s8 %v606
  %v608 = vlaneseq
  %v609 = vshrl.u32 %v608, 7
  %v610 = vsub.s32 %v607, %v609
  %v611 = vrot.slane %v603, %v610
  %v613 = vunpack.c.l.s4 1966171168
  %v614 = vunpack.c.0.s8 %v613
  %v615 = vlaneseq
  %v616 = vshrl.u32 %v615, 7
  %v617 = vsub.s32 %v614, %v616
  %v618 = vrot.slane %v604, %v617
  %v619 = vcombine.high %v611, %v611
  %v620 = vcombine.high %v618, %v618
  %v621 = vlaneseq
  %v622 = vshrl.u32 %v621, 7
  %v623 = vsub.s32 0, %v622
  %v624 = vrot.slane %v619, %v623
  %v625 = vlaneseq
  %v626 = vshrl.u32 %v625, 7
  %v627 = vsub.s32 0, %v626
  %v628 = vrot.slane %v620, %v627
  %v631 = vmul.f32 %v442, %v624
  %v632 = vmul.f32 %v443, %v624
  %v633 = vmul.f32 %v444, %v628
  %v634 = vmul.f32 %v445, %v628
  %v637 = vunpack.c.l.s4 1966171168
  %v638 = vunpack.c.0.s8 %v637
  %v639 = vlaneseq
  %v640 = vshrl.u32 %v639, 7
  %v641 = vsub.s32 %v638, %v640
  %v642 = vrot.slane %v596, %v641
  %v643 = vcombine.high %v642, %v642
  %v645 = vunpack.c.l.s4 1966171168
  %v646 = vunpack.c.0.s8 %v645
  %v647 = vlaneseq
  %v648 = vshrl.u32 %v647, 7
  %v649 = vsub.s32 %v646, %v648
  %v650 = vrot.slane %v642, %v649
  %v652 = vunpack.c.l.s4 1966171168
  %v653 = vunpack.c.0.s8 %v652
  %v654 = vlaneseq
  %v655 = vshrl.u32 %v654, 7
  %v656 = vsub.s32 %v653, %v655
  %v657 = vrot.slane %v643, %v656
  %v658 = vlaneseq
  %v659 = vshrl.u32 %v658, 7
  %v660 = vsub.s32 0, %v659
  %v661 = vrot.slane %v650, %v660
  %v662 = vlaneseq
  %v663 = vshrl.u32 %v662, 7
  %v664 = vsub.s32 0, %v663
  %v665 = vrot.slane %v657, %v664
  %v668 = vadd.f32 %v631, %v661
  %v669 = vadd.f32 %v632, %v661
  %v670 = vadd.f32 %v633, %v665
  %v671 = vadd.f32 %v634, %v665
  %v672 = vmax.f32 %v668, 0.0
  %v673 = vmax.f32 %v669, 0.0
  %v674 = vmax.f32 %v670, 0.0
  %v675 = vmax.f32 %v671, 0.0
  %v676 = vrot.slane %v672, 7
  %v677 = vrot.slane %v673, 7
  %v678 = vrot.slane %v674, 7
  %v679 = vrot.slane %v675, 7
  %v680 = vsel %vm104, %v678, %v679
  %v681 = vsel %vm104, %v677, %v678
  %v682 = vsel %vm104, %v676, %v677
  %v683 = vsel %vm104, %v679, %v676
  %v684 = vrot.slane %v672, 1
  %v685 = vrot.slane %v673, 1
  %v686 = vrot.slane %v674, 1
  %v687 = vrot.slane %v675, 1
  %v688 = vsel %vm113, %v686, %v687
  %v689 = vsel %vm113, %v685, %v686
  %v690 = vsel %vm113, %v684, %v685
  %v691 = vsel %vm113, %v687, %v684
  %v692 = vsel %vm92, %v690, %v683
  %v693 = vsel %vm93, %v689, %v682
  %v694 = vsel %vm94, %v688, %v681
  %v695 = vsel %vm95, %v691, %v680
  %v696 = vsel %vm96, %v683, %v690
  %v697 = vsel %vm97, %v682, %v689
  %v698 = vsel %vm98, %v681, %v688
  %v699 = vsel %vm99, %v680, %v691
  %v700 = vld [vmem:[%s5] sm:$0xff]
  %v701 = vld [vmem:[%s5 + $0x8] sm:$0xff]
  %v702 = vld [vmem:[%s5 + $0x10] sm:$0xff]
  %v703 = vld [vmem:[%s5 + $0x18] sm:$0xff]
  %v704 = vld [vmem:[%s5 + $0x20] sm:$0xff]
  %v705 = vld [vmem:[%s5 + $0x28] sm:$0xff]
  %v706 = vld [vmem:[%s5 + $0x30] sm:$0xff]
  %v707 = vld [vmem:[%s5 + $0x38] sm:$0xff]
  %v708 = vld [vmem:[%s5 + $0x40] sm:$0xff]
  %v709 = vld [vmem:[%s5 + $0x48] sm:$0xff]
  %v710 = vld [vmem:[%s5 + $0x50] sm:$0xff]
  %v711 = vld [vmem:[%s5 + $0x58] sm:$0xff]
  %v712 = vld [vmem:[%s5 + $0x60] sm:$0xff]
  %v713 = vld [vmem:[%s5 + $0x68] sm:$0xff]
  %v714 = vld [vmem:[%s5 + $0x70] sm:$0xff]
  %v715 = vld [vmem:[%s5 + $0x78] sm:$0xff]
  %s716 = scalar_lea.vmem %s5, 128
  %v717 = vld [vmem:[%s716] sm:$0xff]
  %v718 = vld [vmem:[%s716 + $0x8] sm:$0xff]
  %v719 = vld [vmem:[%s716 + $0x10] sm:$0xff]
  %v720 = vld [vmem:[%s716 + $0x18] sm:$0xff]
  %v721 = vld [vmem:[%s716 + $0x20] sm:$0xff]
  %v722 = vld [vmem:[%s716 + $0x28] sm:$0xff]
  %v723 = vld [vmem:[%s716 + $0x30] sm:$0xff]
  %v724 = vld [vmem:[%s716 + $0x38] sm:$0xff]
  %v725 = vld [vmem:[%s716 + $0x40] sm:$0xff]
  %v726 = vld [vmem:[%s716 + $0x48] sm:$0xff]
  %v727 = vld [vmem:[%s716 + $0x50] sm:$0xff]
  %v728 = vld [vmem:[%s716 + $0x58] sm:$0xff]
  %v729 = vld [vmem:[%s716 + $0x60] sm:$0xff]
  %v730 = vld [vmem:[%s716 + $0x68] sm:$0xff]
  %v731 = vld [vmem:[%s716 + $0x70] sm:$0xff]
  %v732 = vld [vmem:[%s716 + $0x78] sm:$0xff]
  %733 = vmatprep.subr.mxu0 0.0
  %734 = vmatpush1.msra.mxu0 %v717
  %735 = vmatprep.subr.mxu0 0.0
  %736 = vmatpush1.msra.mxu0 %v718
  %737 = vmatprep.subr.mxu0 0.0
  %738 = vmatpush1.msra.mxu0 %v719
  %739 = vmatprep.subr.mxu0 0.0
  %740 = vmatpush1.msra.mxu0 %v720
  %741 = vmatprep.subr.mxu0 0.0
  %742 = vmatpush1.msra.mxu0 %v721
  %743 = vmatprep.subr.mxu0 0.0
  %744 = vmatpush1.msra.mxu0 %v722
  %745 = vmatprep.subr.mxu0 0.0
  %746 = vmatpush1.msra.mxu0 %v723
  %747 = vmatprep.subr.mxu0 0.0
  %748 = vmatpush1.msra.mxu0 %v724
  %749 = vmatprep.subr.mxu0 0.0
  %750 = vmatpush1.msra.mxu0 %v725
  %751 = vmatprep.subr.mxu0 0.0
  %752 = vmatpush1.msra.mxu0 %v726
  %753 = vmatprep.subr.mxu0 0.0
  %754 = vmatpush1.msra.mxu0 %v727
  %755 = vmatprep.subr.mxu0 0.0
  %756 = vmatpush1.msra.mxu0 %v728
  %757 = vmatprep.subr.mxu0 0.0
  %758 = vmatpush1.msra.mxu0 %v729
  %759 = vmatprep.subr.mxu0 0.0
  %760 = vmatpush1.msra.mxu0 %v730
  %761 = vmatprep.subr.mxu0 0.0
  %762 = vmatpush1.msra.mxu0 %v731
  %763 = vmatprep.subr.mxu0 0.0
  %764 = vmatpush1.msra.mxu0 %v732
  %765 = vmatprep.subr.mxu0 0.0
  %766 = vmatpush1.msra.mxu0 0.0
  %767 = vmatprep.subr.mxu0 0.0
  %768 = vmatpush1.msra.mxu0 0.0
  %769 = vmatprep.subr.mxu0 0.0
  %770 = vmatpush1.msra.mxu0 0.0
  %771 = vmatprep.subr.mxu0 0.0
  %772 = vmatpush1.msra.mxu0 0.0
  %773 = vmatprep.subr.mxu0 0.0
  %774 = vmatpush1.msra.mxu0 0.0
  %775 = vmatprep.subr.mxu0 0.0
  %776 = vmatpush1.msra.mxu0 0.0
  %777 = vmatprep.subr.mxu0 0.0
  %778 = vmatpush1.msra.mxu0 0.0
  %779 = vmatprep.subr.mxu0 0.0
  %780 = vmatpush1.msra.mxu0 0.0
  %781 = vmatprep.subr.mxu0 0.0
  %782 = vmatpush1.msra.mxu0 0.0
  %783 = vmatprep.subr.mxu0 0.0
  %784 = vmatpush1.msra.mxu0 0.0
  %785 = vmatprep.subr.mxu0 0.0
  %786 = vmatpush1.msra.mxu0 0.0
  %787 = vmatprep.subr.mxu0 0.0
  %788 = vmatpush1.msra.mxu0 0.0
  %789 = vmatprep.subr.mxu0 0.0
  %790 = vmatpush1.msra.mxu0 0.0
  %791 = vmatprep.subr.mxu0 0.0
  %792 = vmatpush1.msra.mxu0 0.0
  %793 = vmatprep.subr.mxu0 0.0
  %794 = vmatpush1.msra.mxu0 0.0
  %795 = vmatprep.subr.mxu0 0.0
  %796 = vmatpush1.msra.mxu0 0.0
  %797 = vmatprep.mubr.f32.mxu0 0.0
  %798 = vmatmul.mubr.f32.gmra.mrb[0].mxu0 %v672
  %v799 = vpop.f32.mrb[0].mxu0
  %v800 = vadd.f32 0.0, %v799
  %v801 = vpop.f32.mrb[0].mxu0
  %802 = vmatprep.mubr.f32.mxu0 0.0
  %803 = vmatmul.mubr.f32.gmra.mrb[0].mxu0 %v673
  %v804 = vpop.f32.mrb[0].mxu0
  %v805 = vadd.f32 0.0, %v804
  %v806 = vpop.f32.mrb[0].mxu0
  %807 = vmatprep.mubr.f32.mxu0 0.0
  %808 = vmatmul.mubr.f32.gmra.mrb[0].mxu0 %v674
  %v809 = vpop.f32.mrb[0].mxu0
  %v810 = vadd.f32 0.0, %v809
  %v811 = vpop.f32.mrb[0].mxu0
  %812 = vmatprep.mubr.f32.mxu0 0.0
  %813 = vmatmul.mubr.f32.gmra.mrb[0].mxu0 %v675
  %v814 = vpop.f32.mrb[0].mxu0
  %v815 = vadd.f32 0.0, %v814
  %v816 = vpop.f32.mrb[0].mxu0
  %817 = vdwg.mxu0
  %818 = vmatprep.subr.mxu0 0.0
  %819 = vmatpush1.msra.mxu0 %v700
  %820 = vmatprep.subr.mxu0 0.0
  %821 = vmatpush1.msra.mxu0 %v701
  %822 = vmatprep.subr.mxu0 0.0
  %823 = vmatpush1.msra.mxu0 %v702
  %824 = vmatprep.subr.mxu0 0.0
  %825 = vmatpush1.msra.mxu0 %v703
  %826 = vmatprep.subr.mxu0 0.0
  %827 = vmatpush1.msra.mxu0 %v704
  %828 = vmatprep.subr.mxu0 0.0
  %829 = vmatpush1.msra.mxu0 %v705
  %830 = vmatprep.subr.mxu0 0.0
  %831 = vmatpush1.msra.mxu0 %v706
  %832 = vmatprep.subr.mxu0 0.0
  %833 = vmatpush1.msra.mxu0 %v707
  %834 = vmatprep.subr.mxu0 0.0
  %835 = vmatpush1.msra.mxu0 %v708
  %836 = vmatprep.subr.mxu0 0.0
  %837 = vmatpush1.msra.mxu0 %v709
  %838 = vmatprep.subr.mxu0 0.0
  %839 = vmatpush1.msra.mxu0 %v710
  %840 = vmatprep.subr.mxu0 0.0
  %841 = vmatpush1.msra.mxu0 %v711
  %842 = vmatprep.subr.mxu0 0.0
  %843 = vmatpush1.msra.mxu0 %v712
  %844 = vmatprep.subr.mxu0 0.0
  %845 = vmatpush1.msra.mxu0 %v713
  %846 = vmatprep.subr.mxu0 0.0
  %847 = vmatpush1.msra.mxu0 %v714
  %848 = vmatprep.subr.mxu0 0.0
  %849 = vmatpush1.msra.mxu0 %v715
  %850 = vmatprep.subr.mxu0 0.0
  %851 = vmatpush1.msra.mxu0 0.0
  %852 = vmatprep.subr.mxu0 0.0
  %853 = vmatpush1.msra.mxu0 0.0
  %854 = vmatprep.subr.mxu0 0.0
  %855 = vmatpush1.msra.mxu0 0.0
  %856 = vmatprep.subr.mxu0 0.0
  %857 = vmatpush1.msra.mxu0 0.0
  %858 = vmatprep.subr.mxu0 0.0
  %859 = vmatpush1.msra.mxu0 0.0
  %860 = vmatprep.subr.mxu0 0.0
  %861 = vmatpush1.msra.mxu0 0.0
  %862 = vmatprep.subr.mxu0 0.0
  %863 = vmatpush1.msra.mxu0 0.0
  %864 = vmatprep.subr.mxu0 0.0
  %865 = vmatpush1.msra.mxu0 0.0
  %866 = vmatprep.subr.mxu0 0.0
  %867 = vmatpush1.msra.mxu0 0.0
  %868 = vmatprep.subr.mxu0 0.0
  %869 = vmatpush1.msra.mxu0 0.0
  %870 = vmatprep.subr.mxu0 0.0
  %871 = vmatpush1.msra.mxu0 0.0
  %872 = vmatprep.subr.mxu0 0.0
  %873 = vmatpush1.msra.mxu0 0.0
  %874 = vmatprep.subr.mxu0 0.0
  %875 = vmatpush1.msra.mxu0 0.0
  %876 = vmatprep.subr.mxu0 0.0
  %877 = vmatpush1.msra.mxu0 0.0
  %878 = vmatprep.subr.mxu0 0.0
  %879 = vmatpush1.msra.mxu0 0.0
  %880 = vmatprep.subr.mxu0 0.0
  %881 = vmatpush1.msra.mxu0 0.0
  %882 = vmatprep.mubr.f32.mxu0 0.0
  %883 = vmatmul.mubr.f32.gmra.mrb[0].mxu0 %v692
  %v884 = vpop.f32.mrb[0].mxu0
  %v885 = vadd.f32 %v800, %v884
  %v886 = vpop.f32.mrb[0].mxu0
  %887 = vmatprep.mubr.f32.mxu0 0.0
  %888 = vmatmul.mubr.f32.gmra.mrb[0].mxu0 %v693
  %v889 = vpop.f32.mrb[0].mxu0
  %v890 = vadd.f32 %v805, %v889
  %v891 = vpop.f32.mrb[0].mxu0
  %892 = vmatprep.mubr.f32.mxu0 0.0
  %893 = vmatmul.mubr.f32.gmra.mrb[0].mxu0 %v694
  %v894 = vpop.f32.mrb[0].mxu0
  %v895 = vadd.f32 %v810, %v894
  %v896 = vpop.f32.mrb[0].mxu0
  %897 = vmatprep.mubr.f32.mxu0 0.0
  %898 = vmatmul.mubr.f32.gmra.mrb[0].mxu0 %v695
  %v899 = vpop.f32.mrb[0].mxu0
  %v900 = vadd.f32 %v815, %v899
  %v901 = vpop.f32.mrb[0].mxu0
  %902 = vdwg.mxu0
  %s903 = scalar_lea.vmem %s5, 256
  %v904 = vld [vmem:[%s903] sm:$0xff]
  %v905 = vld [vmem:[%s903 + $0x8] sm:$0xff]
  %v906 = vld [vmem:[%s903 + $0x10] sm:$0xff]
  %v907 = vld [vmem:[%s903 + $0x18] sm:$0xff]
  %v908 = vld [vmem:[%s903 + $0x20] sm:$0xff]
  %v909 = vld [vmem:[%s903 + $0x28] sm:$0xff]
  %v910 = vld [vmem:[%s903 + $0x30] sm:$0xff]
  %v911 = vld [vmem:[%s903 + $0x38] sm:$0xff]
  %v912 = vld [vmem:[%s903 + $0x40] sm:$0xff]
  %v913 = vld [vmem:[%s903 + $0x48] sm:$0xff]
  %v914 = vld [vmem:[%s903 + $0x50] sm:$0xff]
  %v915 = vld [vmem:[%s903 + $0x58] sm:$0xff]
  %v916 = vld [vmem:[%s903 + $0x60] sm:$0xff]
  %v917 = vld [vmem:[%s903 + $0x68] sm:$0xff]
  %v918 = vld [vmem:[%s903 + $0x70] sm:$0xff]
  %v919 = vld [vmem:[%s903 + $0x78] sm:$0xff]
  %920 = vmatprep.subr.mxu0 0.0
  %921 = vmatpush1.msra.mxu0 %v904
  %922 = vmatprep.subr.mxu0 0.0
  %923 = vmatpush1.msra.mxu0 %v905
  %924 = vmatprep.subr.mxu0 0.0
  %925 = vmatpush1.msra.mxu0 %v906
  %926 = vmatprep.subr.mxu0 0.0
  %927 = vmatpush1.msra.mxu0 %v907
  %928 = vmatprep.subr.mxu0 0.0
  %929 = vmatpush1.msra.mxu0 %v908
  %930 = vmatprep.subr.mxu0 0.0
  %931 = vmatpush1.msra.mxu0 %v909
  %932 = vmatprep.subr.mxu0 0.0
  %933 = vmatpush1.msra.mxu0 %v910
  %934 = vmatprep.subr.mxu0 0.0
  %935 = vmatpush1.msra.mxu0 %v911
  %936 = vmatprep.subr.mxu0 0.0
  %937 = vmatpush1.msra.mxu0 %v912
  %938 = vmatprep.subr.mxu0 0.0
  %939 = vmatpush1.msra.mxu0 %v913
  %940 = vmatprep.subr.mxu0 0.0
  %941 = vmatpush1.msra.mxu0 %v914
  %942 = vmatprep.subr.mxu0 0.0
  %943 = vmatpush1.msra.mxu0 %v915
  %944 = vmatprep.subr.mxu0 0.0
  %945 = vmatpush1.msra.mxu0 %v916
  %946 = vmatprep.subr.mxu0 0.0
  %947 = vmatpush1.msra.mxu0 %v917
  %948 = vmatprep.subr.mxu0 0.0
  %949 = vmatpush1.msra.mxu0 %v918
  %950 = vmatprep.subr.mxu0 0.0
  %951 = vmatpush1.msra.mxu0 %v919
  %952 = vmatprep.subr.mxu0 0.0
  %953 = vmatpush1.msra.mxu0 0.0
  %954 = vmatprep.subr.mxu0 0.0
  %955 = vmatpush1.msra.mxu0 0.0
  %956 = vmatprep.subr.mxu0 0.0
  %957 = vmatpush1.msra.mxu0 0.0
  %958 = vmatprep.subr.mxu0 0.0
  %959 = vmatpush1.msra.mxu0 0.0
  %960 = vmatprep.subr.mxu0 0.0
  %961 = vmatpush1.msra.mxu0 0.0
  %962 = vmatprep.subr.mxu0 0.0
  %963 = vmatpush1.msra.mxu0 0.0
  %964 = vmatprep.subr.mxu0 0.0
  %965 = vmatpush1.msra.mxu0 0.0
  %966 = vmatprep.subr.mxu0 0.0
  %967 = vmatpush1.msra.mxu0 0.0
  %968 = vmatprep.subr.mxu0 0.0
  %969 = vmatpush1.msra.mxu0 0.0
  %970 = vmatprep.subr.mxu0 0.0
  %971 = vmatpush1.msra.mxu0 0.0
  %972 = vmatprep.subr.mxu0 0.0
  %973 = vmatpush1.msra.mxu0 0.0
  %974 = vmatprep.subr.mxu0 0.0
  %975 = vmatpush1.msra.mxu0 0.0
  %976 = vmatprep.subr.mxu0 0.0
  %977 = vmatpush1.msra.mxu0 0.0
  %978 = vmatprep.subr.mxu0 0.0
  %979 = vmatpush1.msra.mxu0 0.0
  %980 = vmatprep.subr.mxu0 0.0
  %981 = vmatpush1.msra.mxu0 0.0
  %982 = vmatprep.subr.mxu0 0.0
  %983 = vmatpush1.msra.mxu0 0.0
  %984 = vmatprep.mubr.f32.mxu0 0.0
  %985 = vmatmul.mubr.f32.gmra.mrb[0].mxu0 %v696
  %v986 = vpop.f32.mrb[0].mxu0
  %v987 = vadd.f32 0.0, %v986
  %v988 = vpop.f32.mrb[0].mxu0
  %989 = vmatprep.mubr.f32.mxu0 0.0
  %990 = vmatmul.mubr.f32.gmra.mrb[0].mxu0 %v697
  %v991 = vpop.f32.mrb[0].mxu0
  %v992 = vadd.f32 0.0, %v991
  %v993 = vpop.f32.mrb[0].mxu0
  %994 = vmatprep.mubr.f32.mxu0 0.0
  %995 = vmatmul.mubr.f32.gmra.mrb[0].mxu0 %v698
  %v996 = vpop.f32.mrb[0].mxu0
  %v997 = vadd.f32 0.0, %v996
  %v998 = vpop.f32.mrb[0].mxu0
  %999 = vmatprep.mubr.f32.mxu0 0.0
  %1000 = vmatmul.mubr.f32.gmra.mrb[0].mxu0 %v699
  %v1001 = vpop.f32.mrb[0].mxu0
  %v1002 = vadd.f32 0.0, %v1001
  %v1003 = vpop.f32.mrb[0].mxu0
  %1004 = vdwg.mxu0
  %v1005 = vadd.f32 %v885, %v987
  %v1006 = vadd.f32 %v890, %v992
  %v1007 = vadd.f32 %v895, %v997
  %v1008 = vadd.f32 %v900, %v1002
  %v1009 = vld [vmem:[%s6] sm:$0x1]
  %v1011 = vlaneseq
  %v1012 = vshrl.u32 %v1011, 7
  %v1013 = vsub.s32 0, %v1012
  %v1014 = vrot.slane %v1009, %v1013
  %v1016 = vadd.f32 %v1005, %v1014
  %v1017 = vadd.f32 %v1006, %v1014
  %v1018 = vadd.f32 %v1007, %v1014
  %v1019 = vadd.f32 %v1008, %v1014
  %v1020 = vmul.f32 %v1016, %v1016
  %v1021 = vmul.f32 %v1017, %v1017
  %v1022 = vmul.f32 %v1018, %v1018
  %v1023 = vmul.f32 %v1019, %v1019
  %v1024 = vadd.f32 %v1016, %v1017
  %v1025 = vrot.slane %v1024, 4
  %v1026 = vadd.f32 %v1024, %v1025
  %v1027 = vrot.slane %v1026, 2
  %v1028 = vadd.f32 %v1026, %v1027
  %v1029 = vrot.slane %v1028, 1
  %v1030 = vadd.f32 %v1028, %v1029
  %v1031 = vadd.f32 %v1018, %v1019
  %v1032 = vrot.slane %v1031, 4
  %v1033 = vadd.f32 %v1031, %v1032
  %v1034 = vrot.slane %v1033, 2
  %v1035 = vadd.f32 %v1033, %v1034
  %v1036 = vrot.slane %v1035, 1
  %v1037 = vadd.f32 %v1035, %v1036
  %v1038 = vadd.f32 %v1020, %v1021
  %v1039 = vrot.slane %v1038, 4
  %v1040 = vadd.f32 %v1038, %v1039
  %v1041 = vrot.slane %v1040, 2
  %v1042 = vadd.f32 %v1040, %v1041
  %v1043 = vrot.slane %v1042, 1
  %v1044 = vadd.f32 %v1042, %v1043
  %v1045 = vadd.f32 %v1022, %v1023
  %v1046 = vrot.slane %v1045, 4
  %v1047 = vadd.f32 %v1045, %v1046
  %v1048 = vrot.slane %v1047, 2
  %v1049 = vadd.f32 %v1047, %v1048
  %v1050 = vrot.slane %v1049, 1
  %v1051 = vadd.f32 %v1049, %v1050
  %v1052 = vsel %vm478, %v1030, %v1037
  %v1053 = vsel %vm480, %v1052, %v1044
  %v1054 = vsel %vm482, %v1053, %v1051
  %1055 = vmatprep.subr.mxu0 0.0
  %1056 = vmatpush1.msra.mxu0 %v484
  %1057 = vmatprep.subr.mxu0 0.0
  %1058 = vmatpush1.msra.mxu0 %v485
  %1059 = vmatprep.subr.mxu0 0.0
  %1060 = vmatpush1.msra.mxu0 %v486
  %1061 = vmatprep.subr.mxu0 0.0
  %1062 = vmatpush1.msra.mxu0 %v487
  %1063 = vmatprep.subr.mxu0 0.0
  %1064 = vmatpush1.msra.mxu0 %v488
  %1065 = vmatprep.subr.mxu0 0.0
  %1066 = vmatpush1.msra.mxu0 %v489
  %1067 = vmatprep.subr.mxu0 0.0
  %1068 = vmatpush1.msra.mxu0 %v490
  %1069 = vmatprep.subr.mxu0 0.0
  %1070 = vmatpush1.msra.mxu0 %v491
  %1071 = vmatprep.subr.mxu0 0.0
  %1072 = vmatpush1.msra.mxu0 %v492
  %1073 = vmatprep.subr.mxu0 0.0
  %1074 = vmatpush1.msra.mxu0 %v493
  %1075 = vmatprep.subr.mxu0 0.0
  %1076 = vmatpush1.msra.mxu0 %v494
  %1077 = vmatprep.subr.mxu0 0.0
  %1078 = vmatpush1.msra.mxu0 %v495
  %1079 = vmatprep.subr.mxu0 0.0
  %1080 = vmatpush1.msra.mxu0 %v496
  %1081 = vmatprep.subr.mxu0 0.0
  %1082 = vmatpush1.msra.mxu0 %v497
  %1083 = vmatprep.subr.mxu0 0.0
  %1084 = vmatpush1.msra.mxu0 %v498
  %1085 = vmatprep.subr.mxu0 0.0
  %1086 = vmatpush1.msra.mxu0 %v499
  %1087 = vmatprep.subr.mxu0 0.0
  %1088 = vmatpush1.msra.mxu0 0.0
  %1089 = vmatprep.subr.mxu0 0.0
  %1090 = vmatpush1.msra.mxu0 0.0
  %1091 = vmatprep.subr.mxu0 0.0
  %1092 = vmatpush1.msra.mxu0 0.0
  %1093 = vmatprep.subr.mxu0 0.0
  %1094 = vmatpush1.msra.mxu0 0.0
  %1095 = vmatprep.subr.mxu0 0.0
  %1096 = vmatpush1.msra.mxu0 0.0
  %1097 = vmatprep.subr.mxu0 0.0
  %1098 = vmatpush1.msra.mxu0 0.0
  %1099 = vmatprep.subr.mxu0 0.0
  %1100 = vmatpush1.msra.mxu0 0.0
  %1101 = vmatprep.subr.mxu0 0.0
  %1102 = vmatpush1.msra.mxu0 0.0
  %1103 = vmatprep.subr.mxu0 0.0
  %1104 = vmatpush1.msra.mxu0 0.0
  %1105 = vmatprep.subr.mxu0 0.0
  %1106 = vmatpush1.msra.mxu0 0.0
  %1107 = vmatprep.subr.mxu0 0.0
  %1108 = vmatpush1.msra.mxu0 0.0
  %1109 = vmatprep.subr.mxu0 0.0
  %1110 = vmatpush1.msra.mxu0 0.0
  %1111 = vmatprep.subr.mxu0 0.0
  %1112 = vmatpush1.msra.mxu0 0.0
  %1113 = vmatprep.subr.mxu0 0.0
  %1114 = vmatpush1.msra.mxu0 0.0
  %1115 = vmatprep.subr.mxu0 0.0
  %1116 = vmatpush1.msra.mxu0 0.0
  %1117 = vmatprep.subr.mxu0 0.0
  %1118 = vmatpush1.msra.mxu0 0.0
  %1119 = vmatprep.mubr.f32.mxu0 0.0
  %1120 = vmatmul.mubr.f32.gmra.mrb[0].mxu0 %v1054
  %v1121 = vpop.f32.mrb[0].mxu0
  %v1122 = vadd.f32 0.0, %v1121
  %v1123 = vpop.f32.mrb[0].mxu0
  %1124 = vdwg.mxu0
  %v1125 = vmul.f32 %v1122, %v1122
  %v1127 = vrot.slane %v1125, 6
  %v1129 = vsub.f32 %v1122, %v1127
  %v1130 = vld [vmem:[%s7] sm:$0x1]
  %v1131 = vadd.f32 %v1129, 1e-05
  %v1132 = vrsqrt.pop %v1131
  %v1134 = vlaneseq
  %v1135 = vshrl.u32 %v1134, 7
  %v1136 = vsub.s32 0, %v1135
  %v1137 = vrot.slane %v1130, %v1136
  %v1139 = vmul.f32 %v1137, %v1132
  %v1140 = vld [vmem:[%s8] sm:$0x1]
  %v1142 = vrot.slane %v1139, 2
  %v1144 = vmul.f32 %v1122, %v1142
  %v1146 = vlaneseq
  %v1147 = vshrl.u32 %v1146, 7
  %v1148 = vsub.s32 0, %v1147
  %v1149 = vrot.slane %v1140, %v1148
  %v1151 = vsub.f32 %v1149, %v1144
  %v1153 = vunpack.c.l.s4 1966171168
  %v1154 = vunpack.c.0.s8 %v1153
  %v1155 = vlaneseq
  %v1156 = vshrl.u32 %v1155, 7
  %v1157 = vsub.s32 %v1154, %v1156
  %v1158 = vrot.slane %v1139, %v1157
  %v1159 = vcombine.high %v1158, %v1158
  %v1161 = vunpack.c.l.s4 1966171168
  %v1162 = vunpack.c.0.s8 %v1161
  %v1163 = vlaneseq
  %v1164 = vshrl.u32 %v1163, 7
  %v1165 = vsub.s32 %v1162, %v1164
  %v1166 = vrot.slane %v1158, %v1165
  %v1168 = vunpack.c.l.s4 1966171168
  %v1169 = vunpack.c.0.s8 %v1168
  %v1170 = vlaneseq
  %v1171 = vshrl.u32 %v1170, 7
  %v1172 = vsub.s32 %v1169, %v1171
  %v1173 = vrot.slane %v1159, %v1172
  %v1174 = vcombine.high %v1166, %v1166
  %v1175 = vcombine.high %v1173, %v1173
  %v1176 = vlaneseq
  %v1177 = vshrl.u32 %v1176, 7
  %v1178 = vsub.s32 0, %v1177
  %v1179 = vrot.slane %v1174, %v1178
  %v1180 = vlaneseq
  %v1181 = vshrl.u32 %v1180, 7
  %v1182 = vsub.s32 0, %v1181
  %v1183 = vrot.slane %v1175, %v1182
  %v1186 = vmul.f32 %v1016, %v1179
  %v1187 = vmul.f32 %v1017, %v1179
  %v1188 = vmul.f32 %v1018, %v1183
  %v1189 = vmul.f32 %v1019, %v1183
  %v1192 = vunpack.c.l.s4 1966171168
  %v1193 = vunpack.c.0.s8 %v1192
  %v1194 = vlaneseq
  %v1195 = vshrl.u32 %v1194, 7
  %v1196 = vsub.s32 %v1193, %v1195
  %v1197 = vrot.slane %v1151, %v1196
  %v1198 = vcombine.high %v1197, %v1197
  %v1200 = vunpack.c.l.s4 1966171168
  %v1201 = vunpack.c.0.s8 %v1200
  %v1202 = vlaneseq
  %v1203 = vshrl.u32 %v1202, 7
  %v1204 = vsub.s32 %v1201, %v1203
  %v1205 = vrot.slane %v1197, %v1204
  %v1207 = vunpack.c.l.s4 1966171168
  %v1208 = vunpack.c.0.s8 %v1207
  %v1209 = vlaneseq
  %v1210 = vshrl.u32 %v1209, 7
  %v1211 = vsub.s32 %v1208, %v1210
  %v1212 = vrot.slane %v1198, %v1211
  %v1213 = vlaneseq
  %v1214 = vshrl.u32 %v1213, 7
  %v1215 = vsub.s32 0, %v1214
  %v1216 = vrot.slane %v1205, %v1215
  %v1217 = vlaneseq
  %v1218 = vshrl.u32 %v1217, 7
  %v1219 = vsub.s32 0, %v1218
  %v1220 = vrot.slane %v1212, %v1219
  %v1223 = vadd.f32 %v1186, %v1216
  %v1224 = vadd.f32 %v1187, %v1216
  %v1225 = vadd.f32 %v1188, %v1220
  %v1226 = vadd.f32 %v1189, %v1220
  %v1227 = vadd.f32 %v1223, %v35
  %v1228 = vadd.f32 %v1224, %v36
  %v1229 = vadd.f32 %v1225, %v37
  %v1230 = vadd.f32 %v1226, %v38
  %1231 = vst [vmem:[%s10] sm:$0xff] %v1227
  %1232 = vst [vmem:[%s10 + $0x8] sm:$0xff] %v1228
  %1233 = vst [vmem:[%s10 + $0x10] sm:$0xff] %v1229
  %1234 = vst [vmem:[%s10 + $0x18] sm:$0xff] %v1230
  // Predicated region
  $region42: #{residual_forward.1} parent=0 // pred_check
    _
  $region43: #{residual_forward.1} parent=0 // pred_check_branch
    %1236 = sbr.rel (0) target = $region45
  $region44: #{residual_forward.1} parent=0 // pred_region
    _
  $region45: #{residual_forward.1} parent=0 // pred_fallthru
    _
  // Predicated region
  $region46: #{residual_forward.1} parent=0 // pred_check
    _
  $region47: #{residual_forward.1} parent=0 // pred_check_branch
    %1238 = sbr.rel (0) target = $region49
  $region48: #{residual_forward.1} parent=0 // pred_region
    _
  $region49: #{residual_forward.1} parent=0 // pred_fallthru
    _

</llo_original>
